<compile_context>
chip_gen: v6e
topology: v6e:2x2x1
jax: 0.10.0
libtpu: 0.0.40
codegen_flags: <defaults>
</compile_context>

<pallas_src>
import math

import jax
import jax.numpy as jnp
from jax.experimental import pallas as pl
from jax.experimental.pallas import tpu as pltpu  # noqa: F401  (TPU backend assumed)

# ----------------------------- hyper-parameters ------------------------------
VOCAB = 64          # vocab size (EOT = highest id, like CLIP)
SEQ = 8             # context length
D_MODEL = 32        # transformer width
N_HEADS = 4
HEAD_DIM = D_MODEL // N_HEADS
N_LAYERS = 2
MLP_DIM = 4 * D_MODEL
EMBED_DIM = 16      # text_projection output dim
LN_EPS = 1e-5

assert SEQ & (SEQ - 1) == 0, "block-diagonal mask trick assumes power-of-two SEQ"


def _layer_norm(x, g, b):
    mu = jnp.mean(x, axis=-1, keepdims=True)
    var = jnp.mean(jnp.square(x - mu), axis=-1, keepdims=True)
    return (x - mu) * jax.lax.rsqrt(var + LN_EPS) * g + b


def _split_heads(x):
    """(N, D) -> (H, N, HEAD_DIM): heads become a leading batch dim.
    Uses lane slices + a leading-dim stack only (no trailing-dim reshapes)."""
    return jnp.stack(
        [x[:, h * HEAD_DIM:(h + 1) * HEAD_DIM] for h in range(N_HEADS)], axis=0)


# --------------------------- fused transformer kernel ------------------------
def _text_transformer_kernel(x_ref, eot_ref,
                             ln1_g_ref, ln1_b_ref, wqkv_ref, bqkv_ref,
                             wo_ref, bo_ref,
                             ln2_g_ref, ln2_b_ref, fc1_w_ref, fc1_b_ref,
                             fc2_w_ref, fc2_b_ref,
                             lnf_g_ref, lnf_b_ref, proj_ref,
                             o_ref):
    N, D = x_ref.shape                      # N = B * SEQ rows, features on lanes
    scale = 1.0 / math.sqrt(HEAD_DIM)

    # Block-diagonal causal mask over the fused (batch*seq) row axis, built
    # in-kernel from iota.  Finite -1e30 (not -inf) so a refactor that fully masks
    # a row can never produce 0/0 NaNs.
    qi = jax.lax.broadcasted_iota(jnp.int32, (N, N), 0)
    ki = jax.lax.broadcasted_iota(jnp.int32, (N, N), 1)
    blk = ~(SEQ - 1)                        # SEQ is a power of two
    same_seq = (qi & blk) == (ki & blk)
    mask = jnp.where(same_seq & (ki <= qi), 0.0, -1e30).astype(jnp.float32)

    x = x_ref[...]                          # (N, D) float32, resident in VMEM

    for l in range(N_LAYERS):               # static unroll over stacked weights
        # ---- x = x + out_proj(MHA(ln_1(x))) ----
        xn = _layer_norm(x, ln1_g_ref[l], ln1_b_ref[l])
        qkv = jnp.dot(xn.astype(jnp.bfloat16), wqkv_ref[l],
                      preferred_element_type=jnp.float32) + bqkv_ref[l]     # (N, 3D)
        q = qkv[:, 0:D] * scale
        k = qkv[:, D:2 * D]
        v = qkv[:, 2 * D:3 * D]
        qh = _split_heads(q).astype(jnp.bfloat16)                           # (H,N,hd)
        kh = _split_heads(k).astype(jnp.bfloat16)
        vh = _split_heads(v).astype(jnp.bfloat16)

        s = jnp.einsum('hqd,hkd->hqk', qh, kh,
                       preferred_element_type=jnp.float32) + mask           # (H,N,N)
        s = s - jnp.max(s, axis=-1, keepdims=True)
        p = jnp.exp(s)
        p = p * pl.reciprocal(jnp.sum(p, axis=-1, keepdims=True), approx=True)
        oh = jnp.einsum('hqk,hkd->hqd', p.astype(jnp.bfloat16), vh,
                        preferred_element_type=jnp.float32)                 # (H,N,hd)

        # Output projection against the full Wo: batched over heads, then reduced.
        att = jnp.einsum('hne,hed->hnd', oh.astype(jnp.bfloat16), wo_ref[l],
                         preferred_element_type=jnp.float32)                # (H,N,D)
        x = x + jnp.sum(att, axis=0) + bo_ref[l]

        # ---- x = x + mlp(ln_2(x)) with QuickGELU ----
        yn = _layer_norm(x, ln2_g_ref[l], ln2_b_ref[l])
        h1 = jnp.dot(yn.astype(jnp.bfloat16), fc1_w_ref[l],
                     preferred_element_type=jnp.float32) + fc1_b_ref[l]     # (N, 4D)
        h1 = h1 * (1.0 / (1.0 + jnp.exp(-1.702 * h1)))                      # QuickGELU
        m = jnp.dot(h1.astype(jnp.bfloat16), fc2_w_ref[l],
                    preferred_element_type=jnp.float32) + fc2_b_ref[l]
        x = x + m

    # ---- head: EOT selection (one-hot matmul) + ln_final + text_projection ----
    x_eot = jnp.dot(eot_ref[...], x, preferred_element_type=jnp.float32)    # (B, D)
    x_eot = _layer_norm(x_eot, lnf_g_ref[...], lnf_b_ref[...])
    o_ref[...] = jnp.dot(x_eot, proj_ref[...], preferred_element_type=jnp.float32)


# ---------------------------- wrapper / param packing -------------------------
def pack_params(params):
    """Stack per-layer weights on a leading layer axis; matmul weights -> bf16
    (kernel accumulates in f32); Wo pre-split per head to (L, H, HEAD_DIM, D)."""
    def stk(name, dtype=jnp.float32):
        return jnp.stack([lp[name] for lp in params['layers']], 0).astype(dtype)

    return dict(
        ln1_g=stk('ln1_g'), ln1_b=stk('ln1_b'),
        wqkv=stk('wqkv', jnp.bfloat16), bqkv=stk('bqkv'),
        wo=stk('wo', jnp.bfloat16).reshape(N_LAYERS, N_HEADS, HEAD_DIM, D_MODEL),
        bo=stk('bo'),
        ln2_g=stk('ln2_g'), ln2_b=stk('ln2_b'),
        fc1_w=stk('fc1_w', jnp.bfloat16), fc1_b=stk('fc1_b'),
        fc2_w=stk('fc2_w', jnp.bfloat16), fc2_b=stk('fc2_b'),
        token_emb=params['token_emb'], pos_emb=params['pos_emb'],
        lnf_g=params['lnf_g'], lnf_b=params['lnf_b'], proj=params['proj'],
    )


def encode_text(text, pk):
    B, S = text.shape
    # XLA glue: data-dependent token-embedding gather, positional add, EOT one-hot.
    x = pk['token_emb'][text] + pk['pos_emb'][None]          # (B, S, D)
    x = x.reshape(B * S, D_MODEL).astype(jnp.float32)        # fold batch into rows
    eot = jnp.argmax(text, axis=-1)                          # CLIP: EOT = highest id
    eot_sel = jax.nn.one_hot(jnp.arange(B) * S + eot, B * S, dtype=jnp.float32)

    return pl.pallas_call(
        _text_transformer_kernel,
        out_shape=jax.ShapeDtypeStruct((B, EMBED_DIM), jnp.float32),
    )(x, eot_sel,
      pk['ln1_g'], pk['ln1_b'], pk['wqkv'], pk['bqkv'], pk['wo'], pk['bo'],
      pk['ln2_g'], pk['ln2_b'], pk['fc1_w'], pk['fc1_b'], pk['fc2_w'], pk['fc2_b'],
      pk['lnf_g'], pk['lnf_b'], pk['proj'])


# --------------------------- deterministic params ----------------------------
def init_params(key):
    def nrm(k, shape, scale):
        return (scale * jax.random.normal(k, shape, jnp.float32)).astype(jnp.float32)

    ks = jax.random.split(key, 3 + N_LAYERS)
    params = {
        'token_emb': nrm(ks[0], (VOCAB, D_MODEL), 0.02),
        'pos_emb': nrm(ks[1], (SEQ, D_MODEL), 0.01),
        'lnf_g': jnp.ones((1, D_MODEL), jnp.float32),
        'lnf_b': jnp.zeros((1, D_MODEL), jnp.float32),
        'proj': nrm(ks[2], (D_MODEL, EMBED_DIM), D_MODEL ** -0.5),
        'layers': [],
    }
    for i in range(N_LAYERS):
        lk = jax.random.split(ks[3 + i], 4)
        params['layers'].append({
            'ln1_g': jnp.ones((1, D_MODEL), jnp.float32),
            'ln1_b': jnp.zeros((1, D_MODEL), jnp.float32),
            'wqkv': nrm(lk[0], (D_MODEL, 3 * D_MODEL), D_MODEL ** -0.5),
            'bqkv': jnp.zeros((1, 3 * D_MODEL), jnp.float32),
            'wo': nrm(lk[1], (D_MODEL, D_MODEL), D_MODEL ** -0.5),
            'bo': jnp.zeros((1, D_MODEL), jnp.float32),
            'ln2_g': jnp.ones((1, D_MODEL), jnp.float32),
            'ln2_b': jnp.zeros((1, D_MODEL), jnp.float32),
            'fc1_w': nrm(lk[2], (D_MODEL, MLP_DIM), D_MODEL ** -0.5),
            'fc1_b': jnp.zeros((1, MLP_DIM), jnp.float32),
            'fc2_w': nrm(lk[3], (MLP_DIM, D_MODEL), MLP_DIM ** -0.5),
            'fc2_b': jnp.zeros((1, D_MODEL), jnp.float32),
        })
    return params


if __name__ == "__main__":
    key = jax.random.PRNGKey(0)
    pkey, tkey = jax.random.split(key)
    params = init_params(pkey)
    packed = pack_params(params)

    B = 2
    text = jax.random.randint(tkey, (B, SEQ), 1, VOCAB - 1, dtype=jnp.int32)
    text = text.at[:, -1].set(VOCAB - 1)    # EOT token = highest id (CLIP convention)

    out = jax.jit(encode_text)(text, packed)
    out = jax.block_until_ready(out)
    assert out.shape == (B, EMBED_DIM), out.shape
    assert bool(jnp.all(jnp.isfinite(out)))
    print("KERNEL_OK")
</pallas_src>

<mosaic_0001>
module attributes {stable_mosaic.version = 11 : i64} {
  func.func @_text_transformer_kernel(%arg0: memref<16x32xf32, #tpu.memory_space<vmem>>, %arg1: memref<2x16xf32, #tpu.memory_space<vmem>>, %arg2: memref<2x1x32xf32, #tpu.memory_space<vmem>>, %arg3: memref<2x1x32xf32, #tpu.memory_space<vmem>>, %arg4: memref<2x32x96xbf16, #tpu.memory_space<vmem>>, %arg5: memref<2x1x96xf32, #tpu.memory_space<vmem>>, %arg6: memref<2x4x8x32xbf16, #tpu.memory_space<vmem>>, %arg7: memref<2x1x32xf32, #tpu.memory_space<vmem>>, %arg8: memref<2x1x32xf32, #tpu.memory_space<vmem>>, %arg9: memref<2x1x32xf32, #tpu.memory_space<vmem>>, %arg10: memref<2x32x128xbf16, #tpu.memory_space<vmem>>, %arg11: memref<2x1x128xf32, #tpu.memory_space<vmem>>, %arg12: memref<2x128x32xbf16, #tpu.memory_space<vmem>>, %arg13: memref<2x1x32xf32, #tpu.memory_space<vmem>>, %arg14: memref<1x32xf32, #tpu.memory_space<vmem>>, %arg15: memref<1x32xf32, #tpu.memory_space<vmem>>, %arg16: memref<32x16xf32, #tpu.memory_space<vmem>>, %arg17: memref<2x16xf32, #tpu.memory_space<vmem>>) attributes {dimension_semantics = [], scalar_prefetch = 0 : i64, scratch_operands = 0 : i64, tpu.core_type = #tpu.core_type<tc>} {
    %0 = tpu.iota {dimensions = array<i32: 0>} : vector<16x16xi32>
    %1 = tpu.iota {dimensions = array<i32: 1>} : vector<16x16xi32>
    %c-8_i32 = arith.constant -8 : i32
    %2 = vector.broadcast %c-8_i32 : i32 to vector<16x16xi32>
    %3 = arith.andi %0, %2 : vector<16x16xi32>
    %c-8_i32_0 = arith.constant -8 : i32
    %4 = vector.broadcast %c-8_i32_0 : i32 to vector<16x16xi32>
    %5 = arith.andi %1, %4 : vector<16x16xi32>
    %6 = arith.cmpi eq, %3, %5 : vector<16x16xi32>
    %7 = arith.cmpi sle, %1, %0 : vector<16x16xi32>
    %8 = arith.andi %6, %7 : vector<16x16xi1>
    %cst = arith.constant 0.000000e+00 : f32
    %cst_1 = arith.constant -1.000000e+30 : f32
    %9 = vector.broadcast %cst : f32 to vector<16x16xf32>
    %10 = vector.broadcast %cst_1 : f32 to vector<16x16xf32>
    %11 = arith.select %8, %9, %10 : vector<16x16xi1>, vector<16x16xf32>
    %c0 = arith.constant 0 : index
    %c0_2 = arith.constant 0 : index
    %12 = vector.load %arg0[%c0, %c0_2] : memref<16x32xf32, #tpu.memory_space<vmem>>, vector<16x32xf32>
    %c0_3 = arith.constant 0 : index
    %c0_4 = arith.constant 0 : index
    %c0_5 = arith.constant 0 : index
    %13 = vector.load %arg2[%c0_3, %c0_4, %c0_5] : memref<2x1x32xf32, #tpu.memory_space<vmem>>, vector<1x1x32xf32>
    %14 = vector.shape_cast %13 : vector<1x1x32xf32> to vector<1x32xf32>
    %c0_6 = arith.constant 0 : index
    %c0_7 = arith.constant 0 : index
    %c0_8 = arith.constant 0 : index
    %15 = vector.load %arg3[%c0_6, %c0_7, %c0_8] : memref<2x1x32xf32, #tpu.memory_space<vmem>>, vector<1x1x32xf32>
    %16 = vector.shape_cast %15 : vector<1x1x32xf32> to vector<1x32xf32>
    %cst_9 = arith.constant dense<0.000000e+00> : vector<16xf32>
    %17 = vector.multi_reduction <add>, %12, %cst_9 [1] : vector<16x32xf32> to vector<16xf32>
    %18 = vector.shape_cast %17 : vector<16xf32> to vector<16x1xf32>
    %cst_10 = arith.constant 3.200000e+01 : f32
    %19 = vector.broadcast %cst_10 : f32 to vector<16x1xf32>
    %20 = arith.divf %18, %19 : vector<16x1xf32>
    %21 = vector.broadcast %20 : vector<16x1xf32> to vector<16x32xf32>
    %22 = arith.subf %12, %21 : vector<16x32xf32>
    %23 = arith.mulf %22, %22 : vector<16x32xf32>
    %cst_11 = arith.constant dense<0.000000e+00> : vector<16xf32>
    %24 = vector.multi_reduction <add>, %23, %cst_11 [1] : vector<16x32xf32> to vector<16xf32>
    %25 = vector.shape_cast %24 : vector<16xf32> to vector<16x1xf32>
    %cst_12 = arith.constant 3.200000e+01 : f32
    %26 = vector.broadcast %cst_12 : f32 to vector<16x1xf32>
    %27 = arith.divf %25, %26 : vector<16x1xf32>
    %28 = vector.broadcast %20 : vector<16x1xf32> to vector<16x32xf32>
    %29 = arith.subf %12, %28 : vector<16x32xf32>
    %cst_13 = arith.constant 9.99999974E-6 : f32
    %30 = vector.broadcast %cst_13 : f32 to vector<16x1xf32>
    %31 = arith.addf %27, %30 : vector<16x1xf32>
    %32 = math.rsqrt %31 : vector<16x1xf32>
    %33 = vector.broadcast %32 : vector<16x1xf32> to vector<16x32xf32>
    %34 = arith.mulf %29, %33 : vector<16x32xf32>
    %35 = vector.broadcast %14 : vector<1x32xf32> to vector<16x32xf32>
    %36 = arith.mulf %34, %35 : vector<16x32xf32>
    %37 = vector.broadcast %16 : vector<1x32xf32> to vector<16x32xf32>
    %38 = arith.addf %36, %37 : vector<16x32xf32>
    %39 = arith.truncf %38 : vector<16x32xf32> to vector<16x32xbf16>
    %c0_14 = arith.constant 0 : index
    %c0_15 = arith.constant 0 : index
    %c0_16 = arith.constant 0 : index
    %40 = vector.load %arg4[%c0_14, %c0_15, %c0_16] : memref<2x32x96xbf16, #tpu.memory_space<vmem>>, vector<1x32x96xbf16>
    %41 = vector.shape_cast %40 : vector<1x32x96xbf16> to vector<32x96xbf16>
    %cst_17 = arith.constant dense<0.000000e+00> : vector<16x96xf32>
    %42 = tpu.matmul %39, %41, %cst_17 {dimension_numbers = #tpu.dot_dimension_numbers<[1], [0], [0], [1], [0, 0, 1, 1], [], []>} : vector<16x32xbf16>, vector<32x96xbf16>, vector<16x96xf32> -> vector<16x96xf32>
    %c0_18 = arith.constant 0 : index
    %c0_19 = arith.constant 0 : index
    %c0_20 = arith.constant 0 : index
    %43 = vector.load %arg5[%c0_18, %c0_19, %c0_20] : memref<2x1x96xf32, #tpu.memory_space<vmem>>, vector<1x1x96xf32>
    %44 = vector.shape_cast %43 : vector<1x1x96xf32> to vector<1x96xf32>
    %45 = vector.broadcast %44 : vector<1x96xf32> to vector<16x96xf32>
    %46 = arith.addf %42, %45 : vector<16x96xf32>
    %47 = vector.extract_strided_slice %46 {offsets = [0, 0], sizes = [16, 32], strides = [1, 1]} : vector<16x96xf32> to vector<16x32xf32>
    %cst_21 = arith.constant 0.353553385 : f32
    %48 = vector.broadcast %cst_21 : f32 to vector<16x32xf32>
    %49 = arith.mulf %47, %48 : vector<16x32xf32>
    %50 = vector.extract_strided_slice %46 {offsets = [0, 32], sizes = [16, 32], strides = [1, 1]} : vector<16x96xf32> to vector<16x32xf32>
    %51 = vector.extract_strided_slice %46 {offsets = [0, 64], sizes = [16, 32], strides = [1, 1]} : vector<16x96xf32> to vector<16x32xf32>
    %52 = vector.extract_strided_slice %49 {offsets = [0, 0], sizes = [16, 8], strides = [1, 1]} : vector<16x32xf32> to vector<16x8xf32>
    %53 = vector.extract_strided_slice %49 {offsets = [0, 8], sizes = [16, 8], strides = [1, 1]} : vector<16x32xf32> to vector<16x8xf32>
    %54 = vector.extract_strided_slice %49 {offsets = [0, 16], sizes = [16, 8], strides = [1, 1]} : vector<16x32xf32> to vector<16x8xf32>
    %55 = vector.extract_strided_slice %49 {offsets = [0, 24], sizes = [16, 8], strides = [1, 1]} : vector<16x32xf32> to vector<16x8xf32>
    %56 = vector.shape_cast %52 : vector<16x8xf32> to vector<1x16x8xf32>
    %57 = vector.shape_cast %53 : vector<16x8xf32> to vector<1x16x8xf32>
    %58 = vector.shape_cast %54 : vector<16x8xf32> to vector<1x16x8xf32>
    %59 = vector.shape_cast %55 : vector<16x8xf32> to vector<1x16x8xf32>
    %60 = tpu.concatenate %56, %57, %58, %59 in 0 : vector<1x16x8xf32>, vector<1x16x8xf32>, vector<1x16x8xf32>, vector<1x16x8xf32> -> vector<4x16x8xf32>
    %61 = arith.truncf %60 : vector<4x16x8xf32> to vector<4x16x8xbf16>
    %62 = vector.extract_strided_slice %50 {offsets = [0, 0], sizes = [16, 8], strides = [1, 1]} : vector<16x32xf32> to vector<16x8xf32>
    %63 = vector.extract_strided_slice %50 {offsets = [0, 8], sizes = [16, 8], strides = [1, 1]} : vector<16x32xf32> to vector<16x8xf32>
    %64 = vector.extract_strided_slice %50 {offsets = [0, 16], sizes = [16, 8], strides = [1, 1]} : vector<16x32xf32> to vector<16x8xf32>
    %65 = vector.extract_strided_slice %50 {offsets = [0, 24], sizes = [16, 8], strides = [1, 1]} : vector<16x32xf32> to vector<16x8xf32>
    %66 = vector.shape_cast %62 : vector<16x8xf32> to vector<1x16x8xf32>
    %67 = vector.shape_cast %63 : vector<16x8xf32> to vector<1x16x8xf32>
    %68 = vector.shape_cast %64 : vector<16x8xf32> to vector<1x16x8xf32>
    %69 = vector.shape_cast %65 : vector<16x8xf32> to vector<1x16x8xf32>
    %70 = tpu.concatenate %66, %67, %68, %69 in 0 : vector<1x16x8xf32>, vector<1x16x8xf32>, vector<1x16x8xf32>, vector<1x16x8xf32> -> vector<4x16x8xf32>
    %71 = arith.truncf %70 : vector<4x16x8xf32> to vector<4x16x8xbf16>
    %72 = vector.extract_strided_slice %51 {offsets = [0, 0], sizes = [16, 8], strides = [1, 1]} : vector<16x32xf32> to vector<16x8xf32>
    %73 = vector.extract_strided_slice %51 {offsets = [0, 8], sizes = [16, 8], strides = [1, 1]} : vector<16x32xf32> to vector<16x8xf32>
    %74 = vector.extract_strided_slice %51 {offsets = [0, 16], sizes = [16, 8], strides = [1, 1]} : vector<16x32xf32> to vector<16x8xf32>
    %75 = vector.extract_strided_slice %51 {offsets = [0, 24], sizes = [16, 8], strides = [1, 1]} : vector<16x32xf32> to vector<16x8xf32>
    %76 = vector.shape_cast %72 : vector<16x8xf32> to vector<1x16x8xf32>
    %77 = vector.shape_cast %73 : vector<16x8xf32> to vector<1x16x8xf32>
    %78 = vector.shape_cast %74 : vector<16x8xf32> to vector<1x16x8xf32>
    %79 = vector.shape_cast %75 : vector<16x8xf32> to vector<1x16x8xf32>
    %80 = tpu.concatenate %76, %77, %78, %79 in 0 : vector<1x16x8xf32>, vector<1x16x8xf32>, vector<1x16x8xf32>, vector<1x16x8xf32> -> vector<4x16x8xf32>
    %81 = arith.truncf %80 : vector<4x16x8xf32> to vector<4x16x8xbf16>
    "tpu.trace_start"() <{level = 10 : i32, message = "hqd,hkd->hqk"}> : () -> ()
    %cst_22 = arith.constant dense<0.000000e+00> : vector<4x16x16xf32>
    %82 = tpu.matmul %61, %71, %cst_22 {dimension_numbers = #tpu.dot_dimension_numbers<[2], [2], [1], [1], [0, 0, 0, 1, 1, 1], [0], [0]>} : vector<4x16x8xbf16>, vector<4x16x8xbf16>, vector<4x16x16xf32> -> vector<4x16x16xf32>
    "tpu.trace_stop"() : () -> ()
    %83 = vector.shape_cast %11 : vector<16x16xf32> to vector<1x16x16xf32>
    %84 = vector.broadcast %83 : vector<1x16x16xf32> to vector<4x16x16xf32>
    %85 = arith.addf %82, %84 : vector<4x16x16xf32>
    %cst_23 = arith.constant dense<0xFF800000> : vector<4x16xf32>
    %86 = vector.multi_reduction <maximumf>, %85, %cst_23 [2] : vector<4x16x16xf32> to vector<4x16xf32>
    %87 = vector.shape_cast %86 : vector<4x16xf32> to vector<4x16x1xf32>
    %88 = vector.broadcast %87 : vector<4x16x1xf32> to vector<4x16x16xf32>
    %89 = arith.subf %85, %88 : vector<4x16x16xf32>
    %90 = math.exp %89 : vector<4x16x16xf32>
    %cst_24 = arith.constant dense<0.000000e+00> : vector<4x16xf32>
    %91 = vector.multi_reduction <add>, %90, %cst_24 [2] : vector<4x16x16xf32> to vector<4x16xf32>
    %92 = vector.shape_cast %91 : vector<4x16xf32> to vector<4x16x1xf32>
    %93 = tpu.reciprocal %92 {approx = true} : vector<4x16x1xf32> -> vector<4x16x1xf32>
    %94 = vector.broadcast %93 : vector<4x16x1xf32> to vector<4x16x16xf32>
    %95 = arith.mulf %90, %94 : vector<4x16x16xf32>
    %96 = arith.truncf %95 : vector<4x16x16xf32> to vector<4x16x16xbf16>
    "tpu.trace_start"() <{level = 10 : i32, message = "hqk,hkd->hqd"}> : () -> ()
    %cst_25 = arith.constant dense<0.000000e+00> : vector<4x16x8xf32>
    %97 = tpu.matmul %96, %81, %cst_25 {dimension_numbers = #tpu.dot_dimension_numbers<[2], [1], [1], [2], [0, 0, 0, 1, 1, 2], [0], [0]>} : vector<4x16x16xbf16>, vector<4x16x8xbf16>, vector<4x16x8xf32> -> vector<4x16x8xf32>
    "tpu.trace_stop"() : () -> ()
    %98 = arith.truncf %97 : vector<4x16x8xf32> to vector<4x16x8xbf16>
    %c0_26 = arith.constant 0 : index
    %c0_27 = arith.constant 0 : index
    %c0_28 = arith.constant 0 : index
    %c0_29 = arith.constant 0 : index
    %99 = vector.load %arg6[%c0_26, %c0_27, %c0_28, %c0_29] : memref<2x4x8x32xbf16, #tpu.memory_space<vmem>>, vector<1x4x8x32xbf16>
    %100 = vector.shape_cast %99 : vector<1x4x8x32xbf16> to vector<4x8x32xbf16>
    "tpu.trace_start"() <{level = 10 : i32, message = "hne,hed->hnd"}> : () -> ()
    %cst_30 = arith.constant dense<0.000000e+00> : vector<4x16x32xf32>
    %101 = tpu.matmul %98, %100, %cst_30 {dimension_numbers = #tpu.dot_dimension_numbers<[2], [1], [1], [2], [0, 0, 0, 1, 1, 2], [0], [0]>} : vector<4x16x8xbf16>, vector<4x8x32xbf16>, vector<4x16x32xf32> -> vector<4x16x32xf32>
    "tpu.trace_stop"() : () -> ()
    %cst_31 = arith.constant dense<0.000000e+00> : vector<16x32xf32>
    %102 = vector.multi_reduction <add>, %101, %cst_31 [0] : vector<4x16x32xf32> to vector<16x32xf32>
    %103 = arith.addf %12, %102 : vector<16x32xf32>
    %c0_32 = arith.constant 0 : index
    %c0_33 = arith.constant 0 : index
    %c0_34 = arith.constant 0 : index
    %104 = vector.load %arg7[%c0_32, %c0_33, %c0_34] : memref<2x1x32xf32, #tpu.memory_space<vmem>>, vector<1x1x32xf32>
    %105 = vector.shape_cast %104 : vector<1x1x32xf32> to vector<1x32xf32>
    %106 = vector.broadcast %105 : vector<1x32xf32> to vector<16x32xf32>
    %107 = arith.addf %103, %106 : vector<16x32xf32>
    %c0_35 = arith.constant 0 : index
    %c0_36 = arith.constant 0 : index
    %c0_37 = arith.constant 0 : index
    %108 = vector.load %arg8[%c0_35, %c0_36, %c0_37] : memref<2x1x32xf32, #tpu.memory_space<vmem>>, vector<1x1x32xf32>
    %109 = vector.shape_cast %108 : vector<1x1x32xf32> to vector<1x32xf32>
    %c0_38 = arith.constant 0 : index
    %c0_39 = arith.constant 0 : index
    %c0_40 = arith.constant 0 : index
    %110 = vector.load %arg9[%c0_38, %c0_39, %c0_40] : memref<2x1x32xf32, #tpu.memory_space<vmem>>, vector<1x1x32xf32>
    %111 = vector.shape_cast %110 : vector<1x1x32xf32> to vector<1x32xf32>
    %cst_41 = arith.constant dense<0.000000e+00> : vector<16xf32>
    %112 = vector.multi_reduction <add>, %107, %cst_41 [1] : vector<16x32xf32> to vector<16xf32>
    %113 = vector.shape_cast %112 : vector<16xf32> to vector<16x1xf32>
    %cst_42 = arith.constant 3.200000e+01 : f32
    %114 = vector.broadcast %cst_42 : f32 to vector<16x1xf32>
    %115 = arith.divf %113, %114 : vector<16x1xf32>
    %116 = vector.broadcast %115 : vector<16x1xf32> to vector<16x32xf32>
    %117 = arith.subf %107, %116 : vector<16x32xf32>
    %118 = arith.mulf %117, %117 : vector<16x32xf32>
    %cst_43 = arith.constant dense<0.000000e+00> : vector<16xf32>
    %119 = vector.multi_reduction <add>, %118, %cst_43 [1] : vector<16x32xf32> to vector<16xf32>
    %120 = vector.shape_cast %119 : vector<16xf32> to vector<16x1xf32>
    %cst_44 = arith.constant 3.200000e+01 : f32
    %121 = vector.broadcast %cst_44 : f32 to vector<16x1xf32>
    %122 = arith.divf %120, %121 : vector<16x1xf32>
    %123 = vector.broadcast %115 : vector<16x1xf32> to vector<16x32xf32>
    %124 = arith.subf %107, %123 : vector<16x32xf32>
    %cst_45 = arith.constant 9.99999974E-6 : f32
    %125 = vector.broadcast %cst_45 : f32 to vector<16x1xf32>
    %126 = arith.addf %122, %125 : vector<16x1xf32>
    %127 = math.rsqrt %126 : vector<16x1xf32>
    %128 = vector.broadcast %127 : vector<16x1xf32> to vector<16x32xf32>
    %129 = arith.mulf %124, %128 : vector<16x32xf32>
    %130 = vector.broadcast %109 : vector<1x32xf32> to vector<16x32xf32>
    %131 = arith.mulf %129, %130 : vector<16x32xf32>
    %132 = vector.broadcast %111 : vector<1x32xf32> to vector<16x32xf32>
    %133 = arith.addf %131, %132 : vector<16x32xf32>
    %134 = arith.truncf %133 : vector<16x32xf32> to vector<16x32xbf16>
    %c0_46 = arith.constant 0 : index
    %c0_47 = arith.constant 0 : index
    %c0_48 = arith.constant 0 : index
    %135 = vector.load %arg10[%c0_46, %c0_47, %c0_48] : memref<2x32x128xbf16, #tpu.memory_space<vmem>>, vector<1x32x128xbf16>
    %136 = vector.shape_cast %135 : vector<1x32x128xbf16> to vector<32x128xbf16>
    %cst_49 = arith.constant dense<0.000000e+00> : vector<16x128xf32>
    %137 = tpu.matmul %134, %136, %cst_49 {dimension_numbers = #tpu.dot_dimension_numbers<[1], [0], [0], [1], [0, 0, 1, 1], [], []>} : vector<16x32xbf16>, vector<32x128xbf16>, vector<16x128xf32> -> vector<16x128xf32>
    %c0_50 = arith.constant 0 : index
    %c0_51 = arith.constant 0 : index
    %c0_52 = arith.constant 0 : index
    %138 = vector.load %arg11[%c0_50, %c0_51, %c0_52] : memref<2x1x128xf32, #tpu.memory_space<vmem>>, vector<1x1x128xf32>
    %139 = vector.shape_cast %138 : vector<1x1x128xf32> to vector<1x128xf32>
    %140 = vector.broadcast %139 : vector<1x128xf32> to vector<16x128xf32>
    %141 = arith.addf %137, %140 : vector<16x128xf32>
    %cst_53 = arith.constant -1.702000e+00 : f32
    %142 = vector.broadcast %cst_53 : f32 to vector<16x128xf32>
    %143 = arith.mulf %142, %141 : vector<16x128xf32>
    %144 = math.exp %143 : vector<16x128xf32>
    %cst_54 = arith.constant 1.000000e+00 : f32
    %145 = vector.broadcast %cst_54 : f32 to vector<16x128xf32>
    %146 = arith.addf %145, %144 : vector<16x128xf32>
    %cst_55 = arith.constant 1.000000e+00 : f32
    %147 = vector.broadcast %cst_55 : f32 to vector<16x128xf32>
    %148 = arith.divf %147, %146 : vector<16x128xf32>
    %149 = arith.mulf %141, %148 : vector<16x128xf32>
    %150 = arith.truncf %149 : vector<16x128xf32> to vector<16x128xbf16>
    %c0_56 = arith.constant 0 : index
    %c0_57 = arith.constant 0 : index
    %c0_58 = arith.constant 0 : index
    %151 = vector.load %arg12[%c0_56, %c0_57, %c0_58] : memref<2x128x32xbf16, #tpu.memory_space<vmem>>, vector<1x128x32xbf16>
    %152 = vector.shape_cast %151 : vector<1x128x32xbf16> to vector<128x32xbf16>
    %cst_59 = arith.constant dense<0.000000e+00> : vector<16x32xf32>
    %153 = tpu.matmul %150, %152, %cst_59 {dimension_numbers = #tpu.dot_dimension_numbers<[1], [0], [0], [1], [0, 0, 1, 1], [], []>} : vector<16x128xbf16>, vector<128x32xbf16>, vector<16x32xf32> -> vector<16x32xf32>
    %c0_60 = arith.constant 0 : index
    %c0_61 = arith.constant 0 : index
    %c0_62 = arith.constant 0 : index
    %154 = vector.load %arg13[%c0_60, %c0_61, %c0_62] : memref<2x1x32xf32, #tpu.memory_space<vmem>>, vector<1x1x32xf32>
    %155 = vector.shape_cast %154 : vector<1x1x32xf32> to vector<1x32xf32>
    %156 = vector.broadcast %155 : vector<1x32xf32> to vector<16x32xf32>
    %157 = arith.addf %153, %156 : vector<16x32xf32>
    %158 = arith.addf %107, %157 : vector<16x32xf32>
    %c1 = arith.constant 1 : index
    %c0_63 = arith.constant 0 : index
    %c0_64 = arith.constant 0 : index
    %159 = vector.load %arg2[%c1, %c0_63, %c0_64] : memref<2x1x32xf32, #tpu.memory_space<vmem>>, vector<1x1x32xf32>
    %160 = vector.shape_cast %159 : vector<1x1x32xf32> to vector<1x32xf32>
    %c1_65 = arith.constant 1 : index
    %c0_66 = arith.constant 0 : index
    %c0_67 = arith.constant 0 : index
    %161 = vector.load %arg3[%c1_65, %c0_66, %c0_67] : memref<2x1x32xf32, #tpu.memory_space<vmem>>, vector<1x1x32xf32>
    %162 = vector.shape_cast %161 : vector<1x1x32xf32> to vector<1x32xf32>
    %cst_68 = arith.constant dense<0.000000e+00> : vector<16xf32>
    %163 = vector.multi_reduction <add>, %158, %cst_68 [1] : vector<16x32xf32> to vector<16xf32>
    %164 = vector.shape_cast %163 : vector<16xf32> to vector<16x1xf32>
    %cst_69 = arith.constant 3.200000e+01 : f32
    %165 = vector.broadcast %cst_69 : f32 to vector<16x1xf32>
    %166 = arith.divf %164, %165 : vector<16x1xf32>
    %167 = vector.broadcast %166 : vector<16x1xf32> to vector<16x32xf32>
    %168 = arith.subf %158, %167 : vector<16x32xf32>
    %169 = arith.mulf %168, %168 : vector<16x32xf32>
    %cst_70 = arith.constant dense<0.000000e+00> : vector<16xf32>
    %170 = vector.multi_reduction <add>, %169, %cst_70 [1] : vector<16x32xf32> to vector<16xf32>
    %171 = vector.shape_cast %170 : vector<16xf32> to vector<16x1xf32>
    %cst_71 = arith.constant 3.200000e+01 : f32
    %172 = vector.broadcast %cst_71 : f32 to vector<16x1xf32>
    %173 = arith.divf %171, %172 : vector<16x1xf32>
    %174 = vector.broadcast %166 : vector<16x1xf32> to vector<16x32xf32>
    %175 = arith.subf %158, %174 : vector<16x32xf32>
    %cst_72 = arith.constant 9.99999974E-6 : f32
    %176 = vector.broadcast %cst_72 : f32 to vector<16x1xf32>
    %177 = arith.addf %173, %176 : vector<16x1xf32>
    %178 = math.rsqrt %177 : vector<16x1xf32>
    %179 = vector.broadcast %178 : vector<16x1xf32> to vector<16x32xf32>
    %180 = arith.mulf %175, %179 : vector<16x32xf32>
    %181 = vector.broadcast %160 : vector<1x32xf32> to vector<16x32xf32>
    %182 = arith.mulf %180, %181 : vector<16x32xf32>
    %183 = vector.broadcast %162 : vector<1x32xf32> to vector<16x32xf32>
    %184 = arith.addf %182, %183 : vector<16x32xf32>
    %185 = arith.truncf %184 : vector<16x32xf32> to vector<16x32xbf16>
    %c1_73 = arith.constant 1 : index
    %c0_74 = arith.constant 0 : index
    %c0_75 = arith.constant 0 : index
    %186 = vector.load %arg4[%c1_73, %c0_74, %c0_75] : memref<2x32x96xbf16, #tpu.memory_space<vmem>>, vector<1x32x96xbf16>
    %187 = vector.shape_cast %186 : vector<1x32x96xbf16> to vector<32x96xbf16>
    %cst_76 = arith.constant dense<0.000000e+00> : vector<16x96xf32>
    %188 = tpu.matmul %185, %187, %cst_76 {dimension_numbers = #tpu.dot_dimension_numbers<[1], [0], [0], [1], [0, 0, 1, 1], [], []>} : vector<16x32xbf16>, vector<32x96xbf16>, vector<16x96xf32> -> vector<16x96xf32>
    %c1_77 = arith.constant 1 : index
    %c0_78 = arith.constant 0 : index
    %c0_79 = arith.constant 0 : index
    %189 = vector.load %arg5[%c1_77, %c0_78, %c0_79] : memref<2x1x96xf32, #tpu.memory_space<vmem>>, vector<1x1x96xf32>
    %190 = vector.shape_cast %189 : vector<1x1x96xf32> to vector<1x96xf32>
    %191 = vector.broadcast %190 : vector<1x96xf32> to vector<16x96xf32>
    %192 = arith.addf %188, %191 : vector<16x96xf32>
    %193 = vector.extract_strided_slice %192 {offsets = [0, 0], sizes = [16, 32], strides = [1, 1]} : vector<16x96xf32> to vector<16x32xf32>
    %cst_80 = arith.constant 0.353553385 : f32
    %194 = vector.broadcast %cst_80 : f32 to vector<16x32xf32>
    %195 = arith.mulf %193, %194 : vector<16x32xf32>
    %196 = vector.extract_strided_slice %192 {offsets = [0, 32], sizes = [16, 32], strides = [1, 1]} : vector<16x96xf32> to vector<16x32xf32>
    %197 = vector.extract_strided_slice %192 {offsets = [0, 64], sizes = [16, 32], strides = [1, 1]} : vector<16x96xf32> to vector<16x32xf32>
    %198 = vector.extract_strided_slice %195 {offsets = [0, 0], sizes = [16, 8], strides = [1, 1]} : vector<16x32xf32> to vector<16x8xf32>
    %199 = vector.extract_strided_slice %195 {offsets = [0, 8], sizes = [16, 8], strides = [1, 1]} : vector<16x32xf32> to vector<16x8xf32>
    %200 = vector.extract_strided_slice %195 {offsets = [0, 16], sizes = [16, 8], strides = [1, 1]} : vector<16x32xf32> to vector<16x8xf32>
    %201 = vector.extract_strided_slice %195 {offsets = [0, 24], sizes = [16, 8], strides = [1, 1]} : vector<16x32xf32> to vector<16x8xf32>
    %202 = vector.shape_cast %198 : vector<16x8xf32> to vector<1x16x8xf32>
    %203 = vector.shape_cast %199 : vector<16x8xf32> to vector<1x16x8xf32>
    %204 = vector.shape_cast %200 : vector<16x8xf32> to vector<1x16x8xf32>
    %205 = vector.shape_cast %201 : vector<16x8xf32> to vector<1x16x8xf32>
    %206 = tpu.concatenate %202, %203, %204, %205 in 0 : vector<1x16x8xf32>, vector<1x16x8xf32>, vector<1x16x8xf32>, vector<1x16x8xf32> -> vector<4x16x8xf32>
    %207 = arith.truncf %206 : vector<4x16x8xf32> to vector<4x16x8xbf16>
    %208 = vector.extract_strided_slice %196 {offsets = [0, 0], sizes = [16, 8], strides = [1, 1]} : vector<16x32xf32> to vector<16x8xf32>
    %209 = vector.extract_strided_slice %196 {offsets = [0, 8], sizes = [16, 8], strides = [1, 1]} : vector<16x32xf32> to vector<16x8xf32>
    %210 = vector.extract_strided_slice %196 {offsets = [0, 16], sizes = [16, 8], strides = [1, 1]} : vector<16x32xf32> to vector<16x8xf32>
    %211 = vector.extract_strided_slice %196 {offsets = [0, 24], sizes = [16, 8], strides = [1, 1]} : vector<16x32xf32> to vector<16x8xf32>
    %212 = vector.shape_cast %208 : vector<16x8xf32> to vector<1x16x8xf32>
    %213 = vector.shape_cast %209 : vector<16x8xf32> to vector<1x16x8xf32>
    %214 = vector.shape_cast %210 : vector<16x8xf32> to vector<1x16x8xf32>
    %215 = vector.shape_cast %211 : vector<16x8xf32> to vector<1x16x8xf32>
    %216 = tpu.concatenate %212, %213, %214, %215 in 0 : vector<1x16x8xf32>, vector<1x16x8xf32>, vector<1x16x8xf32>, vector<1x16x8xf32> -> vector<4x16x8xf32>
    %217 = arith.truncf %216 : vector<4x16x8xf32> to vector<4x16x8xbf16>
    %218 = vector.extract_strided_slice %197 {offsets = [0, 0], sizes = [16, 8], strides = [1, 1]} : vector<16x32xf32> to vector<16x8xf32>
    %219 = vector.extract_strided_slice %197 {offsets = [0, 8], sizes = [16, 8], strides = [1, 1]} : vector<16x32xf32> to vector<16x8xf32>
    %220 = vector.extract_strided_slice %197 {offsets = [0, 16], sizes = [16, 8], strides = [1, 1]} : vector<16x32xf32> to vector<16x8xf32>
    %221 = vector.extract_strided_slice %197 {offsets = [0, 24], sizes = [16, 8], strides = [1, 1]} : vector<16x32xf32> to vector<16x8xf32>
    %222 = vector.shape_cast %218 : vector<16x8xf32> to vector<1x16x8xf32>
    %223 = vector.shape_cast %219 : vector<16x8xf32> to vector<1x16x8xf32>
    %224 = vector.shape_cast %220 : vector<16x8xf32> to vector<1x16x8xf32>
    %225 = vector.shape_cast %221 : vector<16x8xf32> to vector<1x16x8xf32>
    %226 = tpu.concatenate %222, %223, %224, %225 in 0 : vector<1x16x8xf32>, vector<1x16x8xf32>, vector<1x16x8xf32>, vector<1x16x8xf32> -> vector<4x16x8xf32>
    %227 = arith.truncf %226 : vector<4x16x8xf32> to vector<4x16x8xbf16>
    "tpu.trace_start"() <{level = 10 : i32, message = "hqd,hkd->hqk"}> : () -> ()
    %cst_81 = arith.constant dense<0.000000e+00> : vector<4x16x16xf32>
    %228 = tpu.matmul %207, %217, %cst_81 {dimension_numbers = #tpu.dot_dimension_numbers<[2], [2], [1], [1], [0, 0, 0, 1, 1, 1], [0], [0]>} : vector<4x16x8xbf16>, vector<4x16x8xbf16>, vector<4x16x16xf32> -> vector<4x16x16xf32>
    "tpu.trace_stop"() : () -> ()
    %229 = vector.shape_cast %11 : vector<16x16xf32> to vector<1x16x16xf32>
    %230 = vector.broadcast %229 : vector<1x16x16xf32> to vector<4x16x16xf32>
    %231 = arith.addf %228, %230 : vector<4x16x16xf32>
    %cst_82 = arith.constant dense<0xFF800000> : vector<4x16xf32>
    %232 = vector.multi_reduction <maximumf>, %231, %cst_82 [2] : vector<4x16x16xf32> to vector<4x16xf32>
    %233 = vector.shape_cast %232 : vector<4x16xf32> to vector<4x16x1xf32>
    %234 = vector.broadcast %233 : vector<4x16x1xf32> to vector<4x16x16xf32>
    %235 = arith.subf %231, %234 : vector<4x16x16xf32>
    %236 = math.exp %235 : vector<4x16x16xf32>
    %cst_83 = arith.constant dense<0.000000e+00> : vector<4x16xf32>
    %237 = vector.multi_reduction <add>, %236, %cst_83 [2] : vector<4x16x16xf32> to vector<4x16xf32>
    %238 = vector.shape_cast %237 : vector<4x16xf32> to vector<4x16x1xf32>
    %239 = tpu.reciprocal %238 {approx = true} : vector<4x16x1xf32> -> vector<4x16x1xf32>
    %240 = vector.broadcast %239 : vector<4x16x1xf32> to vector<4x16x16xf32>
    %241 = arith.mulf %236, %240 : vector<4x16x16xf32>
    %242 = arith.truncf %241 : vector<4x16x16xf32> to vector<4x16x16xbf16>
    "tpu.trace_start"() <{level = 10 : i32, message = "hqk,hkd->hqd"}> : () -> ()
    %cst_84 = arith.constant dense<0.000000e+00> : vector<4x16x8xf32>
    %243 = tpu.matmul %242, %227, %cst_84 {dimension_numbers = #tpu.dot_dimension_numbers<[2], [1], [1], [2], [0, 0, 0, 1, 1, 2], [0], [0]>} : vector<4x16x16xbf16>, vector<4x16x8xbf16>, vector<4x16x8xf32> -> vector<4x16x8xf32>
    "tpu.trace_stop"() : () -> ()
    %244 = arith.truncf %243 : vector<4x16x8xf32> to vector<4x16x8xbf16>
    %c1_85 = arith.constant 1 : index
    %c0_86 = arith.constant 0 : index
    %c0_87 = arith.constant 0 : index
    %c0_88 = arith.constant 0 : index
    %245 = vector.load %arg6[%c1_85, %c0_86, %c0_87, %c0_88] : memref<2x4x8x32xbf16, #tpu.memory_space<vmem>>, vector<1x4x8x32xbf16>
    %246 = vector.shape_cast %245 : vector<1x4x8x32xbf16> to vector<4x8x32xbf16>
    "tpu.trace_start"() <{level = 10 : i32, message = "hne,hed->hnd"}> : () -> ()
    %cst_89 = arith.constant dense<0.000000e+00> : vector<4x16x32xf32>
    %247 = tpu.matmul %244, %246, %cst_89 {dimension_numbers = #tpu.dot_dimension_numbers<[2], [1], [1], [2], [0, 0, 0, 1, 1, 2], [0], [0]>} : vector<4x16x8xbf16>, vector<4x8x32xbf16>, vector<4x16x32xf32> -> vector<4x16x32xf32>
    "tpu.trace_stop"() : () -> ()
    %cst_90 = arith.constant dense<0.000000e+00> : vector<16x32xf32>
    %248 = vector.multi_reduction <add>, %247, %cst_90 [0] : vector<4x16x32xf32> to vector<16x32xf32>
    %249 = arith.addf %158, %248 : vector<16x32xf32>
    %c1_91 = arith.constant 1 : index
    %c0_92 = arith.constant 0 : index
    %c0_93 = arith.constant 0 : index
    %250 = vector.load %arg7[%c1_91, %c0_92, %c0_93] : memref<2x1x32xf32, #tpu.memory_space<vmem>>, vector<1x1x32xf32>
    %251 = vector.shape_cast %250 : vector<1x1x32xf32> to vector<1x32xf32>
    %252 = vector.broadcast %251 : vector<1x32xf32> to vector<16x32xf32>
    %253 = arith.addf %249, %252 : vector<16x32xf32>
    %c1_94 = arith.constant 1 : index
    %c0_95 = arith.constant 0 : index
    %c0_96 = arith.constant 0 : index
    %254 = vector.load %arg8[%c1_94, %c0_95, %c0_96] : memref<2x1x32xf32, #tpu.memory_space<vmem>>, vector<1x1x32xf32>
    %255 = vector.shape_cast %254 : vector<1x1x32xf32> to vector<1x32xf32>
    %c1_97 = arith.constant 1 : index
    %c0_98 = arith.constant 0 : index
    %c0_99 = arith.constant 0 : index
    %256 = vector.load %arg9[%c1_97, %c0_98, %c0_99] : memref<2x1x32xf32, #tpu.memory_space<vmem>>, vector<1x1x32xf32>
    %257 = vector.shape_cast %256 : vector<1x1x32xf32> to vector<1x32xf32>
    %cst_100 = arith.constant dense<0.000000e+00> : vector<16xf32>
    %258 = vector.multi_reduction <add>, %253, %cst_100 [1] : vector<16x32xf32> to vector<16xf32>
    %259 = vector.shape_cast %258 : vector<16xf32> to vector<16x1xf32>
    %cst_101 = arith.constant 3.200000e+01 : f32
    %260 = vector.broadcast %cst_101 : f32 to vector<16x1xf32>
    %261 = arith.divf %259, %260 : vector<16x1xf32>
    %262 = vector.broadcast %261 : vector<16x1xf32> to vector<16x32xf32>
    %263 = arith.subf %253, %262 : vector<16x32xf32>
    %264 = arith.mulf %263, %263 : vector<16x32xf32>
    %cst_102 = arith.constant dense<0.000000e+00> : vector<16xf32>
    %265 = vector.multi_reduction <add>, %264, %cst_102 [1] : vector<16x32xf32> to vector<16xf32>
    %266 = vector.shape_cast %265 : vector<16xf32> to vector<16x1xf32>
    %cst_103 = arith.constant 3.200000e+01 : f32
    %267 = vector.broadcast %cst_103 : f32 to vector<16x1xf32>
    %268 = arith.divf %266, %267 : vector<16x1xf32>
    %269 = vector.broadcast %261 : vector<16x1xf32> to vector<16x32xf32>
    %270 = arith.subf %253, %269 : vector<16x32xf32>
    %cst_104 = arith.constant 9.99999974E-6 : f32
    %271 = vector.broadcast %cst_104 : f32 to vector<16x1xf32>
    %272 = arith.addf %268, %271 : vector<16x1xf32>
    %273 = math.rsqrt %272 : vector<16x1xf32>
    %274 = vector.broadcast %273 : vector<16x1xf32> to vector<16x32xf32>
    %275 = arith.mulf %270, %274 : vector<16x32xf32>
    %276 = vector.broadcast %255 : vector<1x32xf32> to vector<16x32xf32>
    %277 = arith.mulf %275, %276 : vector<16x32xf32>
    %278 = vector.broadcast %257 : vector<1x32xf32> to vector<16x32xf32>
    %279 = arith.addf %277, %278 : vector<16x32xf32>
    %280 = arith.truncf %279 : vector<16x32xf32> to vector<16x32xbf16>
    %c1_105 = arith.constant 1 : index
    %c0_106 = arith.constant 0 : index
    %c0_107 = arith.constant 0 : index
    %281 = vector.load %arg10[%c1_105, %c0_106, %c0_107] : memref<2x32x128xbf16, #tpu.memory_space<vmem>>, vector<1x32x128xbf16>
    %282 = vector.shape_cast %281 : vector<1x32x128xbf16> to vector<32x128xbf16>
    %cst_108 = arith.constant dense<0.000000e+00> : vector<16x128xf32>
    %283 = tpu.matmul %280, %282, %cst_108 {dimension_numbers = #tpu.dot_dimension_numbers<[1], [0], [0], [1], [0, 0, 1, 1], [], []>} : vector<16x32xbf16>, vector<32x128xbf16>, vector<16x128xf32> -> vector<16x128xf32>
    %c1_109 = arith.constant 1 : index
    %c0_110 = arith.constant 0 : index
    %c0_111 = arith.constant 0 : index
    %284 = vector.load %arg11[%c1_109, %c0_110, %c0_111] : memref<2x1x128xf32, #tpu.memory_space<vmem>>, vector<1x1x128xf32>
    %285 = vector.shape_cast %284 : vector<1x1x128xf32> to vector<1x128xf32>
    %286 = vector.broadcast %285 : vector<1x128xf32> to vector<16x128xf32>
    %287 = arith.addf %283, %286 : vector<16x128xf32>
    %cst_112 = arith.constant -1.702000e+00 : f32
    %288 = vector.broadcast %cst_112 : f32 to vector<16x128xf32>
    %289 = arith.mulf %288, %287 : vector<16x128xf32>
    %290 = math.exp %289 : vector<16x128xf32>
    %cst_113 = arith.constant 1.000000e+00 : f32
    %291 = vector.broadcast %cst_113 : f32 to vector<16x128xf32>
    %292 = arith.addf %291, %290 : vector<16x128xf32>
    %cst_114 = arith.constant 1.000000e+00 : f32
    %293 = vector.broadcast %cst_114 : f32 to vector<16x128xf32>
    %294 = arith.divf %293, %292 : vector<16x128xf32>
    %295 = arith.mulf %287, %294 : vector<16x128xf32>
    %296 = arith.truncf %295 : vector<16x128xf32> to vector<16x128xbf16>
    %c1_115 = arith.constant 1 : index
    %c0_116 = arith.constant 0 : index
    %c0_117 = arith.constant 0 : index
    %297 = vector.load %arg12[%c1_115, %c0_116, %c0_117] : memref<2x128x32xbf16, #tpu.memory_space<vmem>>, vector<1x128x32xbf16>
    %298 = vector.shape_cast %297 : vector<1x128x32xbf16> to vector<128x32xbf16>
    %cst_118 = arith.constant dense<0.000000e+00> : vector<16x32xf32>
    %299 = tpu.matmul %296, %298, %cst_118 {dimension_numbers = #tpu.dot_dimension_numbers<[1], [0], [0], [1], [0, 0, 1, 1], [], []>} : vector<16x128xbf16>, vector<128x32xbf16>, vector<16x32xf32> -> vector<16x32xf32>
    %c1_119 = arith.constant 1 : index
    %c0_120 = arith.constant 0 : index
    %c0_121 = arith.constant 0 : index
    %300 = vector.load %arg13[%c1_119, %c0_120, %c0_121] : memref<2x1x32xf32, #tpu.memory_space<vmem>>, vector<1x1x32xf32>
    %301 = vector.shape_cast %300 : vector<1x1x32xf32> to vector<1x32xf32>
    %302 = vector.broadcast %301 : vector<1x32xf32> to vector<16x32xf32>
    %303 = arith.addf %299, %302 : vector<16x32xf32>
    %304 = arith.addf %253, %303 : vector<16x32xf32>
    %c0_122 = arith.constant 0 : index
    %c0_123 = arith.constant 0 : index
    %305 = vector.load %arg1[%c0_122, %c0_123] : memref<2x16xf32, #tpu.memory_space<vmem>>, vector<2x16xf32>
    %cst_124 = arith.constant dense<0.000000e+00> : vector<2x32xf32>
    %306 = tpu.matmul %305, %304, %cst_124 {dimension_numbers = #tpu.dot_dimension_numbers<[1], [0], [0], [1], [0, 0, 1, 1], [], []>} : vector<2x16xf32>, vector<16x32xf32>, vector<2x32xf32> -> vector<2x32xf32>
    %c0_125 = arith.constant 0 : index
    %c0_126 = arith.constant 0 : index
    %307 = vector.load %arg14[%c0_125, %c0_126] : memref<1x32xf32, #tpu.memory_space<vmem>>, vector<1x32xf32>
    %c0_127 = arith.constant 0 : index
    %c0_128 = arith.constant 0 : index
    %308 = vector.load %arg15[%c0_127, %c0_128] : memref<1x32xf32, #tpu.memory_space<vmem>>, vector<1x32xf32>
    %cst_129 = arith.constant dense<0.000000e+00> : vector<2xf32>
    %309 = vector.multi_reduction <add>, %306, %cst_129 [1] : vector<2x32xf32> to vector<2xf32>
    %310 = vector.shape_cast %309 : vector<2xf32> to vector<2x1xf32>
    %cst_130 = arith.constant 3.200000e+01 : f32
    %311 = vector.broadcast %cst_130 : f32 to vector<2x1xf32>
    %312 = arith.divf %310, %311 : vector<2x1xf32>
    %313 = vector.broadcast %312 : vector<2x1xf32> to vector<2x32xf32>
    %314 = arith.subf %306, %313 : vector<2x32xf32>
    %315 = arith.mulf %314, %314 : vector<2x32xf32>
    %cst_131 = arith.constant dense<0.000000e+00> : vector<2xf32>
    %316 = vector.multi_reduction <add>, %315, %cst_131 [1] : vector<2x32xf32> to vector<2xf32>
    %317 = vector.shape_cast %316 : vector<2xf32> to vector<2x1xf32>
    %cst_132 = arith.constant 3.200000e+01 : f32
    %318 = vector.broadcast %cst_132 : f32 to vector<2x1xf32>
    %319 = arith.divf %317, %318 : vector<2x1xf32>
    %320 = vector.broadcast %312 : vector<2x1xf32> to vector<2x32xf32>
    %321 = arith.subf %306, %320 : vector<2x32xf32>
    %cst_133 = arith.constant 9.99999974E-6 : f32
    %322 = vector.broadcast %cst_133 : f32 to vector<2x1xf32>
    %323 = arith.addf %319, %322 : vector<2x1xf32>
    %324 = math.rsqrt %323 : vector<2x1xf32>
    %325 = vector.broadcast %324 : vector<2x1xf32> to vector<2x32xf32>
    %326 = arith.mulf %321, %325 : vector<2x32xf32>
    %327 = vector.broadcast %307 : vector<1x32xf32> to vector<2x32xf32>
    %328 = arith.mulf %326, %327 : vector<2x32xf32>
    %329 = vector.broadcast %308 : vector<1x32xf32> to vector<2x32xf32>
    %330 = arith.addf %328, %329 : vector<2x32xf32>
    %c0_134 = arith.constant 0 : index
    %c0_135 = arith.constant 0 : index
    %331 = vector.load %arg16[%c0_134, %c0_135] : memref<32x16xf32, #tpu.memory_space<vmem>>, vector<32x16xf32>
    %cst_136 = arith.constant dense<0.000000e+00> : vector<2x16xf32>
    %332 = tpu.matmul %330, %331, %cst_136 {dimension_numbers = #tpu.dot_dimension_numbers<[1], [0], [0], [1], [0, 0, 1, 1], [], []>} : vector<2x32xf32>, vector<32x16xf32>, vector<2x16xf32> -> vector<2x16xf32>
    %c0_137 = arith.constant 0 : index
    %c0_138 = arith.constant 0 : index
    %333 = vector.load %arg17[%c0_137, %c0_138] : memref<2x16xf32, #tpu.memory_space<vmem>>, vector<2x16xf32>
    tpu.vector_store %arg17[%c0_137, %c0_138], %332 {strides = array<i32>} : memref<2x16xf32, #tpu.memory_space<vmem>>, vector<2x16xf32>,
    return
  }
}

</mosaic_0001>

<llo_original>
// kernel: encode_text.1
$region0: #{encode_text.1}
  #allocation0 [shape = 'u32[]', space=smem, size = 0x4, offset = 0x4, fixed_abs, tag = 'smem constant byte address 0x4 - core index']
  #allocation1 [shape = 'u32[144,128]{1,0:T(1,128)}', space=vmem, size = 0x12000, scoped, tag = 'internal scratch']
  %s0 = inlined_call_operand.vmem [shape: f32[16,32], index: 0, kind: input, shape index: {}]
  %s1 = inlined_call_operand.vmem [shape: f32[2,16], index: 1, kind: input, shape index: {}]
  %s2 = inlined_call_operand.vmem [shape: f32[2,1,32], index: 2, kind: input, shape index: {}]
  %s3 = inlined_call_operand.vmem [shape: f32[2,1,32], index: 3, kind: input, shape index: {}]
  %s4 = inlined_call_operand.vmem [shape: bf16[2,32,96], index: 4, kind: input, shape index: {}]
  %s5 = inlined_call_operand.vmem [shape: f32[2,1,96], index: 5, kind: input, shape index: {}]
  %s6 = inlined_call_operand.vmem [shape: bf16[2,4,8,32], index: 6, kind: input, shape index: {}]
  %s7 = inlined_call_operand.vmem [shape: f32[2,1,32], index: 7, kind: input, shape index: {}]
  %s8 = inlined_call_operand.vmem [shape: f32[2,1,32], index: 8, kind: input, shape index: {}]
  %s9 = inlined_call_operand.vmem [shape: f32[2,1,32], index: 9, kind: input, shape index: {}]
  %s10 = inlined_call_operand.vmem [shape: bf16[2,32,128], index: 10, kind: input, shape index: {}]
  %s11 = inlined_call_operand.vmem [shape: f32[2,1,128], index: 11, kind: input, shape index: {}]
  %s12 = inlined_call_operand.vmem [shape: bf16[2,128,32], index: 12, kind: input, shape index: {}]
  %s13 = inlined_call_operand.vmem [shape: f32[2,1,32], index: 13, kind: input, shape index: {}]
  %s14 = inlined_call_operand.vmem [shape: f32[1,32], index: 14, kind: input, shape index: {}]
  %s15 = inlined_call_operand.vmem [shape: f32[1,32], index: 15, kind: input, shape index: {}]
  %s16 = inlined_call_operand.vmem [shape: f32[32,16], index: 16, kind: input, shape index: {}]
  %s17 = inlined_call_operand.hbm [shape: f32[2,16], index: 17, kind: output, shape index: {}]
  %s18 = sld [smem:[#allocation0]]
  $region78: #{encode_text.1} parent=0
    _
  %s20 = ssub.s32 1, %s18
  %s21 = scalar_select 0, %s20, %s18
  $region1: #{encode_text.1} parent=0
    #allocation2 [shape = 'u8[1024]{0}', space=vmem, size = 0x400, scoped, tag = 'output window, operand 0, single buffered']
    #allocation3 [shape = 's32[1]{0}', space=sflag, size = 0x4, scoped, tag = 'scoped memory for encode_text.1']
    %22 = vsyncpa [#allocation3], 0
    // Predicated region
    $region2: #{encode_text.1} parent=1 // pred_check
      _
    $region3: #{encode_text.1} parent=1 // pred_check_branch
      %24 = sbr.rel (0) target = $region5
    $region4: #{encode_text.1} parent=1 // pred_region
      _
    $region5: #{encode_text.1} parent=1 // pred_fallthru
      _
    // Predicated region
    $region6: #{encode_text.1} parent=1 // pred_check
      _
    $region7: #{encode_text.1} parent=1 // pred_check_branch
      %26 = sbr.rel (0) target = $region9
    $region8: #{encode_text.1} parent=1 // pred_region
      _
    $region9: #{encode_text.1} parent=1 // pred_fallthru
      _
    // Predicated region
    $region10: #{encode_text.1} parent=1 // pred_check
      _
    $region11: #{encode_text.1} parent=1 // pred_check_branch
      %28 = sbr.rel (0) target = $region13
    $region12: #{encode_text.1} parent=1 // pred_region
      _
    $region13: #{encode_text.1} parent=1 // pred_fallthru
      _
    // Predicated region
    $region14: #{encode_text.1} parent=1 // pred_check
      _
    $region15: #{encode_text.1} parent=1 // pred_check_branch
      %30 = sbr.rel (0) target = $region17
    $region16: #{encode_text.1} parent=1 // pred_region
      _
    $region17: #{encode_text.1} parent=1 // pred_fallthru
      _
    // Predicated region
    $region18: #{encode_text.1} parent=1 // pred_check
      _
    $region19: #{encode_text.1} parent=1 // pred_check_branch
      %32 = sbr.rel (0) target = $region21
    $region20: #{encode_text.1} parent=1 // pred_region
      _
    $region21: #{encode_text.1} parent=1 // pred_fallthru
      _
    // Predicated region
    $region22: #{encode_text.1} parent=1 // pred_check
      _
    $region23: #{encode_text.1} parent=1 // pred_check_branch
      %34 = sbr.rel (0) target = $region25
    $region24: #{encode_text.1} parent=1 // pred_region
      _
    $region25: #{encode_text.1} parent=1 // pred_fallthru
      _
    // Predicated region
    $region26: #{encode_text.1} parent=1 // pred_check
      _
    $region27: #{encode_text.1} parent=1 // pred_check_branch
      %36 = sbr.rel (0) target = $region29
    $region28: #{encode_text.1} parent=1 // pred_region
      _
    $region29: #{encode_text.1} parent=1 // pred_fallthru
      _
    // Predicated region
    $region30: #{encode_text.1} parent=1 // pred_check
      _
    $region31: #{encode_text.1} parent=1 // pred_check_branch
      %38 = sbr.rel (0) target = $region33
    $region32: #{encode_text.1} parent=1 // pred_region
      _
    $region33: #{encode_text.1} parent=1 // pred_fallthru
      _
    // Predicated region
    $region34: #{encode_text.1} parent=1 // pred_check
      _
    $region35: #{encode_text.1} parent=1 // pred_check_branch
      %40 = sbr.rel (0) target = $region37
    $region36: #{encode_text.1} parent=1 // pred_region
      _
    $region37: #{encode_text.1} parent=1 // pred_fallthru
      _
    // Predicated region
    $region38: #{encode_text.1} parent=1 // pred_check
      _
    $region39: #{encode_text.1} parent=1 // pred_check_branch
      %42 = sbr.rel (0) target = $region41
    $region40: #{encode_text.1} parent=1 // pred_region
      _
    $region41: #{encode_text.1} parent=1 // pred_fallthru
      _
    // Predicated region
    $region42: #{encode_text.1} parent=1 // pred_check
      _
    $region43: #{encode_text.1} parent=1 // pred_check_branch
      %44 = sbr.rel (0) target = $region45
    $region44: #{encode_text.1} parent=1 // pred_region
      _
    $region45: #{encode_text.1} parent=1 // pred_fallthru
      _
    // Predicated region
    $region46: #{encode_text.1} parent=1 // pred_check
      _
    $region47: #{encode_text.1} parent=1 // pred_check_branch
      %46 = sbr.rel (0) target = $region49
    $region48: #{encode_text.1} parent=1 // pred_region
      _
    $region49: #{encode_text.1} parent=1 // pred_fallthru
      _
    // Predicated region
    $region50: #{encode_text.1} parent=1 // pred_check
      _
    $region51: #{encode_text.1} parent=1 // pred_check_branch
      %48 = sbr.rel (0) target = $region53
    $region52: #{encode_text.1} parent=1 // pred_region
      _
    $region53: #{encode_text.1} parent=1 // pred_fallthru
      _
    // Predicated region
    $region54: #{encode_text.1} parent=1 // pred_check
      _
    $region55: #{encode_text.1} parent=1 // pred_check_branch
      %50 = sbr.rel (0) target = $region57
    $region56: #{encode_text.1} parent=1 // pred_region
      _
    $region57: #{encode_text.1} parent=1 // pred_fallthru
      _
    // Predicated region
    $region58: #{encode_text.1} parent=1 // pred_check
      _
    $region59: #{encode_text.1} parent=1 // pred_check_branch
      %52 = sbr.rel (0) target = $region61
    $region60: #{encode_text.1} parent=1 // pred_region
      _
    $region61: #{encode_text.1} parent=1 // pred_fallthru
      _
    // Predicated region
    $region62: #{encode_text.1} parent=1 // pred_check
      _
    $region63: #{encode_text.1} parent=1 // pred_check_branch
      %54 = sbr.rel (0) target = $region65
    $region64: #{encode_text.1} parent=1 // pred_region
      _
    $region65: #{encode_text.1} parent=1 // pred_fallthru
      _
    // Predicated region
    $region66: #{encode_text.1} parent=1 // pred_check
      _
    $region67: #{encode_text.1} parent=1 // pred_check_branch
      %56 = sbr.rel (0) target = $region69
    $region68: #{encode_text.1} parent=1 // pred_region
      _
    $region69: #{encode_text.1} parent=1 // pred_fallthru
      _
    %v58 = vlaneseq
    %v59 = vshrl.u32 %v58, 7
    %v60 = vadd.s32 %v59, 8
    %v61 = vlaneseq
    %v62 = vand.u32 %v61, 127
    %v63 = vand.u32 %v59, 4294967288
    %v64 = vand.u32 %v60, 4294967288
    %v65 = vand.u32 %v62, 4294967288
    %vm66 = vcmp.eq.s32.totalorder %v63, %v65
    %vm67 = vcmp.eq.s32.totalorder %v64, %v65
    %vm68 = vcmp.le.s32.totalorder %v62, %v59
    %vm69 = vcmp.le.s32.totalorder %v62, %v60
    %vm70 = vmand %vm66, %vm68
    %vm71 = vmand %vm67, %vm69
    %v72 = vsel %vm70, 0.0, -1e+30
    %v73 = vsel %vm71, 0.0, -1e+30
    %v74 = vld [vmem:[%s0] sm:$0xff]
    %v75 = vld [vmem:[%s0 + $0x8] sm:$0xff]
    %v76 = vld [vmem:[%s2] sm:$0x1]
    %v77 = vld [vmem:[%s3] sm:$0x1]
    %vm78 = vcmask 261120
    %v79 = vsel %vm78, %v74, 0.0
    %80 = vadd.xlane.f32.xlu0 %v79
    %v81 = vpop.xlane.xlu0 %80
    %v82 = vsel %vm78, %v75, 0.0
    %83 = vadd.xlane.f32.xlu0 %v82
    %v84 = vpop.xlane.xlu0 %83
    %v85 = vrcp.pop 32.0
    %v86 = vmul.f32 %v81, %v85
    %v87 = vmul.f32 %v84, %v85
    %v88 = vsub.f32 %v74, %v86
    %v89 = vsub.f32 %v75, %v87
    %v90 = vmul.f32 %v88, %v88
    %v91 = vmul.f32 %v89, %v89
    %v92 = vsel %vm78, %v90, 0.0
    %93 = vadd.xlane.f32.xlu0 %v92
    %v94 = vpop.xlane.xlu0 %93
    %v95 = vsel %vm78, %v91, 0.0
    %96 = vadd.xlane.f32.xlu0 %v95
    %v97 = vpop.xlane.xlu0 %96
    %v98 = vmul.f32 %v94, %v85
    %v99 = vmul.f32 %v97, %v85
    %v100 = vadd.f32 %v98, 1e-05
    %v101 = vadd.f32 %v99, 1e-05
    %v102 = vrsqrt.pop %v100
    %v103 = vrsqrt.pop %v101
    %v104 = vmul.f32 %v88, %v102
    %v105 = vmul.f32 %v89, %v103
    %v107 = vlaneseq
    %v108 = vshrl.u32 %v107, 7
    %v109 = vsub.s32 0, %v108
    %v110 = vrot.slane %v76, %v109
    %v112 = vmul.f32 %v104, %v110
    %v113 = vmul.f32 %v105, %v110
    %v115 = vlaneseq
    %v116 = vshrl.u32 %v115, 7
    %v117 = vsub.s32 0, %v116
    %v118 = vrot.slane %v77, %v117
    %v120 = vadd.f32 %v112, %v118
    %v121 = vadd.f32 %v113, %v118
    %v122 = vpack.c.bf16 %v121, %v120
    %v123 = vld [vmem:[%s4] sm:$0xf]
    %v124 = vld [vmem:[%s4 + $0x4] sm:$0xf]
    %v125 = vld [vmem:[%s4 + $0x8] sm:$0xf]
    %v126 = vld [vmem:[%s4 + $0xc] sm:$0xf]
    %v127 = vld [vmem:[%s5] sm:$0x1]
    %v129 = vlaneseq
    %v130 = vshrl.u32 %v129, 7
    %v131 = vsub.s32 0, %v130
    %v132 = vrot.slane %v127, %v131
    %v138 = vunpack.c.l.b16 %v123
    %v139 = vunpack.c.l.b16 %v124
    %v140 = vunpack.c.l.b16 %v125
    %v141 = vunpack.c.l.b16 %v126
    %v142 = vpack.c.b16 %v139, %v138
    %v143 = vpack.c.b16 %v141, %v140
    %v147 = vsel %vm78, %v122, 0
    %149 = vmatprep.subr.bf16.mxu0 0
    %150 = vmatpush1.bf16.msra.mxu0 0
    %151 = vmatprep.subr.bf16.mxu0 0
    %152 = vmatpush1.bf16.msra.mxu0 0
    %153 = vmatprep.subr.bf16.mxu0 0
    %154 = vmatpush1.bf16.msra.mxu0 0
    %155 = vmatprep.subr.bf16.mxu0 0
    %156 = vmatpush1.bf16.msra.mxu0 0
    %157 = vmatprep.subr.bf16.mxu0 0
    %158 = vmatpush1.bf16.msra.mxu0 0
    %159 = vmatprep.subr.bf16.mxu0 0
    %160 = vmatpush1.bf16.msra.mxu0 0
    %161 = vmatprep.subr.bf16.mxu0 0
    %162 = vmatpush1.bf16.msra.mxu0 %v143
    %163 = vmatprep.subr.bf16.mxu0 0
    %164 = vmatpush1.bf16.msra.mxu0 %v142
    %165 = vmatprep.subr.bf16.mxu0 0
    %166 = vmatpush2.bf16.msra.mxu0 0
    %167 = vmatprep.subr.bf16.mxu0 0
    %168 = vmatpush2.bf16.msra.mxu0 0
    %169 = vmatprep.subr.bf16.mxu0 0
    %170 = vmatpush2.bf16.msra.mxu0 0
    %171 = vmatprep.subr.bf16.mxu0 0
    %172 = vmatpush2.bf16.msra.mxu0 0
    %173 = vmatprep.subr.bf16.mxu0 0
    %174 = vmatpush2.bf16.msra.mxu0 0
    %175 = vmatprep.subr.bf16.mxu0 0
    %176 = vmatpush2.bf16.msra.mxu0 0
    %177 = vmatprep.subr.bf16.mxu0 0
    %178 = vmatpush2.bf16.msra.mxu0 0
    %179 = vmatprep.subr.bf16.mxu0 0
    %180 = vmatpush2.bf16.msra.mxu0 0
    %181 = vmatprep.mubr.bf16.mxu0 0
    %182 = vmatmul.mubr.bf16.gmra.mxu0 %v147
    %v183 = vpop.f32.mrf.mxu0
    %v184 = vadd.f32 %v132, %v183
    %v185 = vpop.f32.mrf.mxu0
    %v186 = vpop.f32.mrf.mxu0
    %v187 = vadd.f32 %v132, %v186
    %v188 = vpop.f32.mrf.mxu0
    %189 = vdwg.mxu0
    %v190 = vmul.f32 %v184, 0.35355338
    %v191 = vmul.f32 %v187, 0.35355338
    %194 = vrot.lane.b32.xlu0 %v190, 120
    %v195 = vpop.permute.xlu0 %194
    %196 = vrot.lane.b32.xlu0 %v191, 120
    %v197 = vpop.permute.xlu0 %196
    %200 = vrot.lane.b32.xlu0 %v190, 112
    %v201 = vpop.permute.xlu0 %200
    %202 = vrot.lane.b32.xlu0 %v191, 112
    %v203 = vpop.permute.xlu0 %202
    %206 = vrot.lane.b32.xlu0 %v190, 104
    %v207 = vpop.permute.xlu0 %206
    %208 = vrot.lane.b32.xlu0 %v191, 104
    %v209 = vpop.permute.xlu0 %208
    %v212 = vpack.c.bf16 %v191, %v190
    %v213 = vpack.c.bf16 %v197, %v195
    %v214 = vpack.c.bf16 %v203, %v201
    %v215 = vpack.c.bf16 %v209, %v207
    %218 = vrot.lane.b32.xlu0 %v184, 120
    %v219 = vpop.permute.xlu0 %218
    %220 = vrot.lane.b32.xlu0 %v187, 120
    %v221 = vpop.permute.xlu0 %220
    %224 = vrot.lane.b32.xlu0 %v184, 112
    %v225 = vpop.permute.xlu0 %224
    %226 = vrot.lane.b32.xlu0 %v187, 112
    %v227 = vpop.permute.xlu0 %226
    %230 = vrot.lane.b32.xlu0 %v184, 104
    %v231 = vpop.permute.xlu0 %230
    %232 = vrot.lane.b32.xlu0 %v187, 104
    %v233 = vpop.permute.xlu0 %232
    %v236 = vpack.c.bf16 %v187, %v184
    %v237 = vpack.c.bf16 %v221, %v219
    %v238 = vpack.c.bf16 %v227, %v225
    %v239 = vpack.c.bf16 %v233, %v231
    %241 = vrot.lane.b32.xlu0 %v236, 96
    %v242 = vpop.permute.xlu0 %241
    %vm243 = vcmask 64512
    %v245 = vsel %vm243, %v212, 0
    %v248 = vsel %vm243, %v242, 0
    %250 = vmatprep.subr.bf16.mxu0 0
    %251 = vmatpush1.bf16.xpose.msra.mxu0 0
    %252 = vmatprep.subr.bf16.mxu0 0
    %253 = vmatpush1.bf16.xpose.msra.mxu0 0
    %254 = vmatprep.subr.bf16.mxu0 0
    %255 = vmatpush1.bf16.xpose.msra.mxu0 0
    %256 = vmatprep.subr.bf16.mxu0 0
    %257 = vmatpush1.bf16.xpose.msra.mxu0 0
    %258 = vmatprep.subr.bf16.mxu0 0
    %259 = vmatpush1.bf16.xpose.msra.mxu0 0
    %260 = vmatprep.subr.bf16.mxu0 0
    %261 = vmatpush1.bf16.xpose.msra.mxu0 0
    %262 = vmatprep.subr.bf16.mxu0 0
    %263 = vmatpush1.bf16.xpose.msra.mxu0 0
    %264 = vmatprep.subr.bf16.mxu0 0
    %265 = vmatpush1.bf16.xpose.msra.mxu0 %v248
    %266 = vmatprep.subr.bf16.mxu0 0
    %267 = vmatpush2.bf16.xpose.msra.mxu0 0
    %268 = vmatprep.subr.bf16.mxu0 0
    %269 = vmatpush2.bf16.xpose.msra.mxu0 0
    %270 = vmatprep.subr.bf16.mxu0 0
    %271 = vmatpush2.bf16.xpose.msra.mxu0 0
    %272 = vmatprep.subr.bf16.mxu0 0
    %273 = vmatpush2.bf16.xpose.msra.mxu0 0
    %274 = vmatprep.subr.bf16.mxu0 0
    %275 = vmatpush2.bf16.xpose.msra.mxu0 0
    %276 = vmatprep.subr.bf16.mxu0 0
    %277 = vmatpush2.bf16.xpose.msra.mxu0 0
    %278 = vmatprep.subr.bf16.mxu0 0
    %279 = vmatpush2.bf16.xpose.msra.mxu0 0
    %280 = vmatprep.subr.bf16.mxu0 0
    %281 = vmatpush2.bf16.xpose.msra.mxu0 0
    %282 = vmatprep.mubr.bf16.mxu0 0
    %283 = vmatmul.mubr.bf16.gmra.mxu0 %v245
    %v284 = vpop.f32.mrf.mxu0
    %v285 = vadd.f32 %v72, %v284
    %v286 = vpop.f32.mrf.mxu0
    %v287 = vpop.f32.mrf.mxu0
    %v288 = vadd.f32 %v73, %v287
    %v289 = vpop.f32.mrf.mxu0
    %290 = vdwg.mxu0
    %292 = vrot.lane.b32.xlu0 %v237, 96
    %v293 = vpop.permute.xlu0 %292
    %v295 = vsel %vm243, %v213, 0
    %v298 = vsel %vm243, %v293, 0
    %300 = vmatprep.subr.bf16.mxu0 0
    %301 = vmatpush1.bf16.xpose.msra.mxu0 0
    %302 = vmatprep.subr.bf16.mxu0 0
    %303 = vmatpush1.bf16.xpose.msra.mxu0 0
    %304 = vmatprep.subr.bf16.mxu0 0
    %305 = vmatpush1.bf16.xpose.msra.mxu0 0
    %306 = vmatprep.subr.bf16.mxu0 0
    %307 = vmatpush1.bf16.xpose.msra.mxu0 0
    %308 = vmatprep.subr.bf16.mxu0 0
    %309 = vmatpush1.bf16.xpose.msra.mxu0 0
    %310 = vmatprep.subr.bf16.mxu0 0
    %311 = vmatpush1.bf16.xpose.msra.mxu0 0
    %312 = vmatprep.subr.bf16.mxu0 0
    %313 = vmatpush1.bf16.xpose.msra.mxu0 0
    %314 = vmatprep.subr.bf16.mxu0 0
    %315 = vmatpush1.bf16.xpose.msra.mxu0 %v298
    %316 = vmatprep.subr.bf16.mxu0 0
    %317 = vmatpush2.bf16.xpose.msra.mxu0 0
    %318 = vmatprep.subr.bf16.mxu0 0
    %319 = vmatpush2.bf16.xpose.msra.mxu0 0
    %320 = vmatprep.subr.bf16.mxu0 0
    %321 = vmatpush2.bf16.xpose.msra.mxu0 0
    %322 = vmatprep.subr.bf16.mxu0 0
    %323 = vmatpush2.bf16.xpose.msra.mxu0 0
    %324 = vmatprep.subr.bf16.mxu0 0
    %325 = vmatpush2.bf16.xpose.msra.mxu0 0
    %326 = vmatprep.subr.bf16.mxu0 0
    %327 = vmatpush2.bf16.xpose.msra.mxu0 0
    %328 = vmatprep.subr.bf16.mxu0 0
    %329 = vmatpush2.bf16.xpose.msra.mxu0 0
    %330 = vmatprep.subr.bf16.mxu0 0
    %331 = vmatpush2.bf16.xpose.msra.mxu0 0
    %332 = vmatprep.mubr.bf16.mxu0 0
    %333 = vmatmul.mubr.bf16.gmra.mxu0 %v295
    %v334 = vpop.f32.mrf.mxu0
    %v335 = vadd.f32 %v72, %v334
    %v336 = vpop.f32.mrf.mxu0
    %v337 = vpop.f32.mrf.mxu0
    %v338 = vadd.f32 %v73, %v337
    %v339 = vpop.f32.mrf.mxu0
    %340 = vdwg.mxu0
    %342 = vrot.lane.b32.xlu0 %v238, 96
    %v343 = vpop.permute.xlu0 %342
    %v345 = vsel %vm243, %v214, 0
    %v348 = vsel %vm243, %v343, 0
    %350 = vmatprep.subr.bf16.mxu0 0
    %351 = vmatpush1.bf16.xpose.msra.mxu0 0
    %352 = vmatprep.subr.bf16.mxu0 0
    %353 = vmatpush1.bf16.xpose.msra.mxu0 0
    %354 = vmatprep.subr.bf16.mxu0 0
    %355 = vmatpush1.bf16.xpose.msra.mxu0 0
    %356 = vmatprep.subr.bf16.mxu0 0
    %357 = vmatpush1.bf16.xpose.msra.mxu0 0
    %358 = vmatprep.subr.bf16.mxu0 0
    %359 = vmatpush1.bf16.xpose.msra.mxu0 0
    %360 = vmatprep.subr.bf16.mxu0 0
    %361 = vmatpush1.bf16.xpose.msra.mxu0 0
    %362 = vmatprep.subr.bf16.mxu0 0
    %363 = vmatpush1.bf16.xpose.msra.mxu0 0
    %364 = vmatprep.subr.bf16.mxu0 0
    %365 = vmatpush1.bf16.xpose.msra.mxu0 %v348
    %366 = vmatprep.subr.bf16.mxu0 0
    %367 = vmatpush2.bf16.xpose.msra.mxu0 0
    %368 = vmatprep.subr.bf16.mxu0 0
    %369 = vmatpush2.bf16.xpose.msra.mxu0 0
    %370 = vmatprep.subr.bf16.mxu0 0
    %371 = vmatpush2.bf16.xpose.msra.mxu0 0
    %372 = vmatprep.subr.bf16.mxu0 0
    %373 = vmatpush2.bf16.xpose.msra.mxu0 0
    %374 = vmatprep.subr.bf16.mxu0 0
    %375 = vmatpush2.bf16.xpose.msra.mxu0 0
    %376 = vmatprep.subr.bf16.mxu0 0
    %377 = vmatpush2.bf16.xpose.msra.mxu0 0
    %378 = vmatprep.subr.bf16.mxu0 0
    %379 = vmatpush2.bf16.xpose.msra.mxu0 0
    %380 = vmatprep.subr.bf16.mxu0 0
    %381 = vmatpush2.bf16.xpose.msra.mxu0 0
    %382 = vmatprep.mubr.bf16.mxu0 0
    %383 = vmatmul.mubr.bf16.gmra.mxu0 %v345
    %v384 = vpop.f32.mrf.mxu0
    %v385 = vadd.f32 %v72, %v384
    %v386 = vpop.f32.mrf.mxu0
    %v387 = vpop.f32.mrf.mxu0
    %v388 = vadd.f32 %v73, %v387
    %v389 = vpop.f32.mrf.mxu0
    %390 = vdwg.mxu0
    %392 = vrot.lane.b32.xlu0 %v239, 96
    %v393 = vpop.permute.xlu0 %392
    %v395 = vsel %vm243, %v215, 0
    %v398 = vsel %vm243, %v393, 0
    %400 = vmatprep.subr.bf16.mxu0 0
    %401 = vmatpush1.bf16.xpose.msra.mxu0 0
    %402 = vmatprep.subr.bf16.mxu0 0
    %403 = vmatpush1.bf16.xpose.msra.mxu0 0
    %404 = vmatprep.subr.bf16.mxu0 0
    %405 = vmatpush1.bf16.xpose.msra.mxu0 0
    %406 = vmatprep.subr.bf16.mxu0 0
    %407 = vmatpush1.bf16.xpose.msra.mxu0 0
    %408 = vmatprep.subr.bf16.mxu0 0
    %409 = vmatpush1.bf16.xpose.msra.mxu0 0
    %410 = vmatprep.subr.bf16.mxu0 0
    %411 = vmatpush1.bf16.xpose.msra.mxu0 0
    %412 = vmatprep.subr.bf16.mxu0 0
    %413 = vmatpush1.bf16.xpose.msra.mxu0 0
    %414 = vmatprep.subr.bf16.mxu0 0
    %415 = vmatpush1.bf16.xpose.msra.mxu0 %v398
    %416 = vmatprep.subr.bf16.mxu0 0
    %417 = vmatpush2.bf16.xpose.msra.mxu0 0
    %418 = vmatprep.subr.bf16.mxu0 0
    %419 = vmatpush2.bf16.xpose.msra.mxu0 0
    %420 = vmatprep.subr.bf16.mxu0 0
    %421 = vmatpush2.bf16.xpose.msra.mxu0 0
    %422 = vmatprep.subr.bf16.mxu0 0
    %423 = vmatpush2.bf16.xpose.msra.mxu0 0
    %424 = vmatprep.subr.bf16.mxu0 0
    %425 = vmatpush2.bf16.xpose.msra.mxu0 0
    %426 = vmatprep.subr.bf16.mxu0 0
    %427 = vmatpush2.bf16.xpose.msra.mxu0 0
    %428 = vmatprep.subr.bf16.mxu0 0
    %429 = vmatpush2.bf16.xpose.msra.mxu0 0
    %430 = vmatprep.subr.bf16.mxu0 0
    %431 = vmatpush2.bf16.xpose.msra.mxu0 0
    %432 = vmatprep.mubr.bf16.mxu0 0
    %433 = vmatmul.mubr.bf16.gmra.mxu0 %v395
    %v434 = vpop.f32.mrf.mxu0
    %v435 = vadd.f32 %v72, %v434
    %v436 = vpop.f32.mrf.mxu0
    %v437 = vpop.f32.mrf.mxu0
    %v438 = vadd.f32 %v73, %v437
    %v439 = vpop.f32.mrf.mxu0
    %440 = vdwg.mxu0
    %vm441 = vcmask 130048
    %v442 = vsel %vm441, %v285, -inf
    %443 = vmax.xlane.f32.xlu0 %v442
    %v444 = vpop.xlane.xlu0 %443
    %v445 = vsel %vm441, %v288, -inf
    %446 = vmax.xlane.f32.xlu0 %v445
    %v447 = vpop.xlane.xlu0 %446
    %v448 = vsel %vm441, %v335, -inf
    %449 = vmax.xlane.f32.xlu0 %v448
    %v450 = vpop.xlane.xlu0 %449
    %v451 = vsel %vm441, %v338, -inf
    %452 = vmax.xlane.f32.xlu0 %v451
    %v453 = vpop.xlane.xlu0 %452
    %v454 = vsel %vm441, %v385, -inf
    %455 = vmax.xlane.f32.xlu0 %v454
    %v456 = vpop.xlane.xlu0 %455
    %v457 = vsel %vm441, %v388, -inf
    %458 = vmax.xlane.f32.xlu0 %v457
    %v459 = vpop.xlane.xlu0 %458
    %v460 = vsel %vm441, %v435, -inf
    %461 = vmax.xlane.f32.xlu0 %v460
    %v462 = vpop.xlane.xlu0 %461
    %v463 = vsel %vm441, %v438, -inf
    %464 = vmax.xlane.f32.xlu0 %v463
    %v465 = vpop.xlane.xlu0 %464
    %v466 = vsub.f32 %v285, %v444
    %v467 = vsub.f32 %v288, %v447
    %v468 = vsub.f32 %v335, %v450
    %v469 = vsub.f32 %v338, %v453
    %v470 = vsub.f32 %v385, %v456
    %v471 = vsub.f32 %v388, %v459
    %v472 = vsub.f32 %v435, %v462
    %v473 = vsub.f32 %v438, %v465
    %v474 = vmul.f32 %v466, 1.442695
    %v475 = vpow.pop %v474
    %v476 = vmul.f32 %v467, 1.442695
    %v477 = vpow.pop %v476
    %v478 = vmul.f32 %v468, 1.442695
    %v479 = vpow.pop %v478
    %v480 = vmul.f32 %v469, 1.442695
    %v481 = vpow.pop %v480
    %v482 = vmul.f32 %v470, 1.442695
    %v483 = vpow.pop %v482
    %v484 = vmul.f32 %v471, 1.442695
    %v485 = vpow.pop %v484
    %v486 = vmul.f32 %v472, 1.442695
    %v487 = vpow.pop %v486
    %v488 = vmul.f32 %v473, 1.442695
    %v489 = vpow.pop %v488
    %v490 = vsel %vm441, %v475, 0.0
    %491 = vadd.xlane.f32.xlu0 %v490
    %v492 = vpop.xlane.xlu0 %491
    %v493 = vsel %vm441, %v477, 0.0
    %494 = vadd.xlane.f32.xlu0 %v493
    %v495 = vpop.xlane.xlu0 %494
    %v496 = vsel %vm441, %v479, 0.0
    %497 = vadd.xlane.f32.xlu0 %v496
    %v498 = vpop.xlane.xlu0 %497
    %v499 = vsel %vm441, %v481, 0.0
    %500 = vadd.xlane.f32.xlu0 %v499
    %v501 = vpop.xlane.xlu0 %500
    %v502 = vsel %vm441, %v483, 0.0
    %503 = vadd.xlane.f32.xlu0 %v502
    %v504 = vpop.xlane.xlu0 %503
    %v505 = vsel %vm441, %v485, 0.0
    %506 = vadd.xlane.f32.xlu0 %v505
    %v507 = vpop.xlane.xlu0 %506
    %v508 = vsel %vm441, %v487, 0.0
    %509 = vadd.xlane.f32.xlu0 %v508
    %v510 = vpop.xlane.xlu0 %509
    %v511 = vsel %vm441, %v489, 0.0
    %512 = vadd.xlane.f32.xlu0 %v511
    %v513 = vpop.xlane.xlu0 %512
    %v514 = vrcp.pop %v492
    %v515 = vrcp.pop %v495
    %v516 = vrcp.pop %v498
    %v517 = vrcp.pop %v501
    %v518 = vrcp.pop %v504
    %v519 = vrcp.pop %v507
    %v520 = vrcp.pop %v510
    %v521 = vrcp.pop %v513
    %v522 = vmul.f32 %v475, %v514
    %v523 = vmul.f32 %v477, %v515
    %v524 = vmul.f32 %v479, %v516
    %v525 = vmul.f32 %v481, %v517
    %v526 = vmul.f32 %v483, %v518
    %v527 = vmul.f32 %v485, %v519
    %v528 = vmul.f32 %v487, %v520
    %v529 = vmul.f32 %v489, %v521
    %v530 = vpack.c.bf16 %v523, %v522
    %v531 = vpack.c.bf16 %v525, %v524
    %v532 = vpack.c.bf16 %v527, %v526
    %v533 = vpack.c.bf16 %v529, %v528
    %534 = vrot.lane.b32.xlu0 %v236, 64
    %v535 = vpop.permute.xlu0 %534
    %v538 = vsel %vm441, %v530, 0
    %540 = vmatprep.subr.bf16.mxu0 0
    %541 = vmatpush1.bf16.msra.mxu0 0
    %542 = vmatprep.subr.bf16.mxu0 0
    %543 = vmatpush1.bf16.msra.mxu0 0
    %544 = vmatprep.subr.bf16.mxu0 0
    %545 = vmatpush1.bf16.msra.mxu0 0
    %546 = vmatprep.subr.bf16.mxu0 0
    %547 = vmatpush1.bf16.msra.mxu0 0
    %548 = vmatprep.subr.bf16.mxu0 0
    %549 = vmatpush1.bf16.msra.mxu0 0
    %550 = vmatprep.subr.bf16.mxu0 0
    %551 = vmatpush1.bf16.msra.mxu0 0
    %552 = vmatprep.subr.bf16.mxu0 0
    %553 = vmatpush1.bf16.msra.mxu0 0
    %554 = vmatprep.subr.bf16.mxu0 0
    %555 = vmatpush1.bf16.msra.mxu0 %v535
    %556 = vmatprep.subr.bf16.mxu0 0
    %557 = vmatpush2.bf16.msra.mxu0 0
    %558 = vmatprep.subr.bf16.mxu0 0
    %559 = vmatpush2.bf16.msra.mxu0 0
    %560 = vmatprep.subr.bf16.mxu0 0
    %561 = vmatpush2.bf16.msra.mxu0 0
    %562 = vmatprep.subr.bf16.mxu0 0
    %563 = vmatpush2.bf16.msra.mxu0 0
    %564 = vmatprep.subr.bf16.mxu0 0
    %565 = vmatpush2.bf16.msra.mxu0 0
    %566 = vmatprep.subr.bf16.mxu0 0
    %567 = vmatpush2.bf16.msra.mxu0 0
    %568 = vmatprep.subr.bf16.mxu0 0
    %569 = vmatpush2.bf16.msra.mxu0 0
    %570 = vmatprep.subr.bf16.mxu0 0
    %571 = vmatpush2.bf16.msra.mxu0 0
    %572 = vmatprep.mubr.bf16.mxu0 0
    %573 = vmatmul.mubr.bf16.gmra.mxu0 %v538
    %v574 = vpop.f32.mrf.mxu0
    %v575 = vadd.f32 0.0, %v574
    %v576 = vpop.f32.mrf.mxu0
    %v577 = vpop.f32.mrf.mxu0
    %v578 = vadd.f32 0.0, %v577
    %v579 = vpop.f32.mrf.mxu0
    %580 = vdwg.mxu0
    %581 = vrot.lane.b32.xlu0 %v237, 64
    %v582 = vpop.permute.xlu0 %581
    %v585 = vsel %vm441, %v531, 0
    %587 = vmatprep.subr.bf16.mxu0 0
    %588 = vmatpush1.bf16.msra.mxu0 0
    %589 = vmatprep.subr.bf16.mxu0 0
    %590 = vmatpush1.bf16.msra.mxu0 0
    %591 = vmatprep.subr.bf16.mxu0 0
    %592 = vmatpush1.bf16.msra.mxu0 0
    %593 = vmatprep.subr.bf16.mxu0 0
    %594 = vmatpush1.bf16.msra.mxu0 0
    %595 = vmatprep.subr.bf16.mxu0 0
    %596 = vmatpush1.bf16.msra.mxu0 0
    %597 = vmatprep.subr.bf16.mxu0 0
    %598 = vmatpush1.bf16.msra.mxu0 0
    %599 = vmatprep.subr.bf16.mxu0 0
    %600 = vmatpush1.bf16.msra.mxu0 0
    %601 = vmatprep.subr.bf16.mxu0 0
    %602 = vmatpush1.bf16.msra.mxu0 %v582
    %603 = vmatprep.subr.bf16.mxu0 0
    %604 = vmatpush2.bf16.msra.mxu0 0
    %605 = vmatprep.subr.bf16.mxu0 0
    %606 = vmatpush2.bf16.msra.mxu0 0
    %607 = vmatprep.subr.bf16.mxu0 0
    %608 = vmatpush2.bf16.msra.mxu0 0
    %609 = vmatprep.subr.bf16.mxu0 0
    %610 = vmatpush2.bf16.msra.mxu0 0
    %611 = vmatprep.subr.bf16.mxu0 0
    %612 = vmatpush2.bf16.msra.mxu0 0
    %613 = vmatprep.subr.bf16.mxu0 0
    %614 = vmatpush2.bf16.msra.mxu0 0
    %615 = vmatprep.subr.bf16.mxu0 0
    %616 = vmatpush2.bf16.msra.mxu0 0
    %617 = vmatprep.subr.bf16.mxu0 0
    %618 = vmatpush2.bf16.msra.mxu0 0
    %619 = vmatprep.mubr.bf16.mxu0 0
    %620 = vmatmul.mubr.bf16.gmra.mxu0 %v585
    %v621 = vpop.f32.mrf.mxu0
    %v622 = vadd.f32 0.0, %v621
    %v623 = vpop.f32.mrf.mxu0
    %v624 = vpop.f32.mrf.mxu0
    %v625 = vadd.f32 0.0, %v624
    %v626 = vpop.f32.mrf.mxu0
    %627 = vdwg.mxu0
    %628 = vrot.lane.b32.xlu0 %v238, 64
    %v629 = vpop.permute.xlu0 %628
    %v632 = vsel %vm441, %v532, 0
    %634 = vmatprep.subr.bf16.mxu0 0
    %635 = vmatpush1.bf16.msra.mxu0 0
    %636 = vmatprep.subr.bf16.mxu0 0
    %637 = vmatpush1.bf16.msra.mxu0 0
    %638 = vmatprep.subr.bf16.mxu0 0
    %639 = vmatpush1.bf16.msra.mxu0 0
    %640 = vmatprep.subr.bf16.mxu0 0
    %641 = vmatpush1.bf16.msra.mxu0 0
    %642 = vmatprep.subr.bf16.mxu0 0
    %643 = vmatpush1.bf16.msra.mxu0 0
    %644 = vmatprep.subr.bf16.mxu0 0
    %645 = vmatpush1.bf16.msra.mxu0 0
    %646 = vmatprep.subr.bf16.mxu0 0
    %647 = vmatpush1.bf16.msra.mxu0 0
    %648 = vmatprep.subr.bf16.mxu0 0
    %649 = vmatpush1.bf16.msra.mxu0 %v629
    %650 = vmatprep.subr.bf16.mxu0 0
    %651 = vmatpush2.bf16.msra.mxu0 0
    %652 = vmatprep.subr.bf16.mxu0 0
    %653 = vmatpush2.bf16.msra.mxu0 0
    %654 = vmatprep.subr.bf16.mxu0 0
    %655 = vmatpush2.bf16.msra.mxu0 0
    %656 = vmatprep.subr.bf16.mxu0 0
    %657 = vmatpush2.bf16.msra.mxu0 0
    %658 = vmatprep.subr.bf16.mxu0 0
    %659 = vmatpush2.bf16.msra.mxu0 0
    %660 = vmatprep.subr.bf16.mxu0 0
    %661 = vmatpush2.bf16.msra.mxu0 0
    %662 = vmatprep.subr.bf16.mxu0 0
    %663 = vmatpush2.bf16.msra.mxu0 0
    %664 = vmatprep.subr.bf16.mxu0 0
    %665 = vmatpush2.bf16.msra.mxu0 0
    %666 = vmatprep.mubr.bf16.mxu0 0
    %667 = vmatmul.mubr.bf16.gmra.mxu0 %v632
    %v668 = vpop.f32.mrf.mxu0
    %v669 = vadd.f32 0.0, %v668
    %v670 = vpop.f32.mrf.mxu0
    %v671 = vpop.f32.mrf.mxu0
    %v672 = vadd.f32 0.0, %v671
    %v673 = vpop.f32.mrf.mxu0
    %674 = vdwg.mxu0
    %675 = vrot.lane.b32.xlu0 %v239, 64
    %v676 = vpop.permute.xlu0 %675
    %v679 = vsel %vm441, %v533, 0
    %681 = vmatprep.subr.bf16.mxu0 0
    %682 = vmatpush1.bf16.msra.mxu0 0
    %683 = vmatprep.subr.bf16.mxu0 0
    %684 = vmatpush1.bf16.msra.mxu0 0
    %685 = vmatprep.subr.bf16.mxu0 0
    %686 = vmatpush1.bf16.msra.mxu0 0
    %687 = vmatprep.subr.bf16.mxu0 0
    %688 = vmatpush1.bf16.msra.mxu0 0
    %689 = vmatprep.subr.bf16.mxu0 0
    %690 = vmatpush1.bf16.msra.mxu0 0
    %691 = vmatprep.subr.bf16.mxu0 0
    %692 = vmatpush1.bf16.msra.mxu0 0
    %693 = vmatprep.subr.bf16.mxu0 0
    %694 = vmatpush1.bf16.msra.mxu0 0
    %695 = vmatprep.subr.bf16.mxu0 0
    %696 = vmatpush1.bf16.msra.mxu0 %v676
    %697 = vmatprep.subr.bf16.mxu0 0
    %698 = vmatpush2.bf16.msra.mxu0 0
    %699 = vmatprep.subr.bf16.mxu0 0
    %700 = vmatpush2.bf16.msra.mxu0 0
    %701 = vmatprep.subr.bf16.mxu0 0
    %702 = vmatpush2.bf16.msra.mxu0 0
    %703 = vmatprep.subr.bf16.mxu0 0
    %704 = vmatpush2.bf16.msra.mxu0 0
    %705 = vmatprep.subr.bf16.mxu0 0
    %706 = vmatpush2.bf16.msra.mxu0 0
    %707 = vmatprep.subr.bf16.mxu0 0
    %708 = vmatpush2.bf16.msra.mxu0 0
    %709 = vmatprep.subr.bf16.mxu0 0
    %710 = vmatpush2.bf16.msra.mxu0 0
    %711 = vmatprep.subr.bf16.mxu0 0
    %712 = vmatpush2.bf16.msra.mxu0 0
    %713 = vmatprep.mubr.bf16.mxu0 0
    %714 = vmatmul.mubr.bf16.gmra.mxu0 %v679
    %v715 = vpop.f32.mrf.mxu0
    %v716 = vadd.f32 0.0, %v715
    %v717 = vpop.f32.mrf.mxu0
    %v718 = vpop.f32.mrf.mxu0
    %v719 = vadd.f32 0.0, %v718
    %v720 = vpop.f32.mrf.mxu0
    %721 = vdwg.mxu0
    %v722 = vpack.c.bf16 %v578, %v575
    %v723 = vpack.c.bf16 %v625, %v622
    %v724 = vpack.c.bf16 %v672, %v669
    %v725 = vpack.c.bf16 %v719, %v716
    %v726 = vld [vmem:[%s6] sm:$0xf]
    %v727 = vld [vmem:[%s6 + $0x4] sm:$0xf]
    %v728 = vld [vmem:[%s6 + $0x8] sm:$0xf]
    %v729 = vld [vmem:[%s6 + $0xc] sm:$0xf]
    %v731 = vsel %vm243, %v722, 0
    %vm733 = vcmask 1043456
    %v735 = vsel %vm733, %v726, 0
    %737 = vmatprep.subr.bf16.mxu0 0
    %738 = vmatpush1.bf16.msra.mxu0 0
    %739 = vmatprep.subr.bf16.mxu0 0
    %740 = vmatpush1.bf16.msra.mxu0 0
    %741 = vmatprep.subr.bf16.mxu0 0
    %742 = vmatpush1.bf16.msra.mxu0 0
    %743 = vmatprep.subr.bf16.mxu0 0
    %744 = vmatpush1.bf16.msra.mxu0 0
    %745 = vmatprep.subr.bf16.mxu0 0
    %746 = vmatpush1.bf16.msra.mxu0 0
    %747 = vmatprep.subr.bf16.mxu0 0
    %748 = vmatpush1.bf16.msra.mxu0 0
    %749 = vmatprep.subr.bf16.mxu0 0
    %750 = vmatpush1.bf16.msra.mxu0 0
    %751 = vmatprep.subr.bf16.mxu0 0
    %752 = vmatpush1.bf16.msra.mxu0 %v735
    %753 = vmatprep.subr.bf16.mxu0 0
    %754 = vmatpush2.bf16.msra.mxu0 0
    %755 = vmatprep.subr.bf16.mxu0 0
    %756 = vmatpush2.bf16.msra.mxu0 0
    %757 = vmatprep.subr.bf16.mxu0 0
    %758 = vmatpush2.bf16.msra.mxu0 0
    %759 = vmatprep.subr.bf16.mxu0 0
    %760 = vmatpush2.bf16.msra.mxu0 0
    %761 = vmatprep.subr.bf16.mxu0 0
    %762 = vmatpush2.bf16.msra.mxu0 0
    %763 = vmatprep.subr.bf16.mxu0 0
    %764 = vmatpush2.bf16.msra.mxu0 0
    %765 = vmatprep.subr.bf16.mxu0 0
    %766 = vmatpush2.bf16.msra.mxu0 0
    %767 = vmatprep.subr.bf16.mxu0 0
    %768 = vmatpush2.bf16.msra.mxu0 0
    %769 = vmatprep.mubr.bf16.mxu0 0
    %770 = vmatmul.mubr.bf16.gmra.mxu0 %v731
    %v771 = vpop.f32.mrf.mxu0
    %v772 = vadd.f32 0.0, %v771
    %v773 = vpop.f32.mrf.mxu0
    %v774 = vpop.f32.mrf.mxu0
    %v775 = vadd.f32 0.0, %v774
    %v776 = vpop.f32.mrf.mxu0
    %777 = vdwg.mxu0
    %v779 = vsel %vm243, %v723, 0
    %v782 = vsel %vm733, %v727, 0
    %784 = vmatprep.subr.bf16.mxu0 0
    %785 = vmatpush1.bf16.msra.mxu0 0
    %786 = vmatprep.subr.bf16.mxu0 0
    %787 = vmatpush1.bf16.msra.mxu0 0
    %788 = vmatprep.subr.bf16.mxu0 0
    %789 = vmatpush1.bf16.msra.mxu0 0
    %790 = vmatprep.subr.bf16.mxu0 0
    %791 = vmatpush1.bf16.msra.mxu0 0
    %792 = vmatprep.subr.bf16.mxu0 0
    %793 = vmatpush1.bf16.msra.mxu0 0
    %794 = vmatprep.subr.bf16.mxu0 0
    %795 = vmatpush1.bf16.msra.mxu0 0
    %796 = vmatprep.subr.bf16.mxu0 0
    %797 = vmatpush1.bf16.msra.mxu0 0
    %798 = vmatprep.subr.bf16.mxu0 0
    %799 = vmatpush1.bf16.msra.mxu0 %v782
    %800 = vmatprep.subr.bf16.mxu0 0
    %801 = vmatpush2.bf16.msra.mxu0 0
    %802 = vmatprep.subr.bf16.mxu0 0
    %803 = vmatpush2.bf16.msra.mxu0 0
    %804 = vmatprep.subr.bf16.mxu0 0
    %805 = vmatpush2.bf16.msra.mxu0 0
    %806 = vmatprep.subr.bf16.mxu0 0
    %807 = vmatpush2.bf16.msra.mxu0 0
    %808 = vmatprep.subr.bf16.mxu0 0
    %809 = vmatpush2.bf16.msra.mxu0 0
    %810 = vmatprep.subr.bf16.mxu0 0
    %811 = vmatpush2.bf16.msra.mxu0 0
    %812 = vmatprep.subr.bf16.mxu0 0
    %813 = vmatpush2.bf16.msra.mxu0 0
    %814 = vmatprep.subr.bf16.mxu0 0
    %815 = vmatpush2.bf16.msra.mxu0 0
    %816 = vmatprep.mubr.bf16.mxu0 0
    %817 = vmatmul.mubr.bf16.gmra.mxu0 %v779
    %v818 = vpop.f32.mrf.mxu0
    %v819 = vadd.f32 0.0, %v818
    %v820 = vpop.f32.mrf.mxu0
    %v821 = vpop.f32.mrf.mxu0
    %v822 = vadd.f32 0.0, %v821
    %v823 = vpop.f32.mrf.mxu0
    %824 = vdwg.mxu0
    %v826 = vsel %vm243, %v724, 0
    %v829 = vsel %vm733, %v728, 0
    %831 = vmatprep.subr.bf16.mxu0 0
    %832 = vmatpush1.bf16.msra.mxu0 0
    %833 = vmatprep.subr.bf16.mxu0 0
    %834 = vmatpush1.bf16.msra.mxu0 0
    %835 = vmatprep.subr.bf16.mxu0 0
    %836 = vmatpush1.bf16.msra.mxu0 0
    %837 = vmatprep.subr.bf16.mxu0 0
    %838 = vmatpush1.bf16.msra.mxu0 0
    %839 = vmatprep.subr.bf16.mxu0 0
    %840 = vmatpush1.bf16.msra.mxu0 0
    %841 = vmatprep.subr.bf16.mxu0 0
    %842 = vmatpush1.bf16.msra.mxu0 0
    %843 = vmatprep.subr.bf16.mxu0 0
    %844 = vmatpush1.bf16.msra.mxu0 0
    %845 = vmatprep.subr.bf16.mxu0 0
    %846 = vmatpush1.bf16.msra.mxu0 %v829
    %847 = vmatprep.subr.bf16.mxu0 0
    %848 = vmatpush2.bf16.msra.mxu0 0
    %849 = vmatprep.subr.bf16.mxu0 0
    %850 = vmatpush2.bf16.msra.mxu0 0
    %851 = vmatprep.subr.bf16.mxu0 0
    %852 = vmatpush2.bf16.msra.mxu0 0
    %853 = vmatprep.subr.bf16.mxu0 0
    %854 = vmatpush2.bf16.msra.mxu0 0
    %855 = vmatprep.subr.bf16.mxu0 0
    %856 = vmatpush2.bf16.msra.mxu0 0
    %857 = vmatprep.subr.bf16.mxu0 0
    %858 = vmatpush2.bf16.msra.mxu0 0
    %859 = vmatprep.subr.bf16.mxu0 0
    %860 = vmatpush2.bf16.msra.mxu0 0
    %861 = vmatprep.subr.bf16.mxu0 0
    %862 = vmatpush2.bf16.msra.mxu0 0
    %863 = vmatprep.mubr.bf16.mxu0 0
    %864 = vmatmul.mubr.bf16.gmra.mxu0 %v826
    %v865 = vpop.f32.mrf.mxu0
    %v866 = vadd.f32 0.0, %v865
    %v867 = vpop.f32.mrf.mxu0
    %v868 = vpop.f32.mrf.mxu0
    %v869 = vadd.f32 0.0, %v868
    %v870 = vpop.f32.mrf.mxu0
    %871 = vdwg.mxu0
    %v873 = vsel %vm243, %v725, 0
    %v876 = vsel %vm733, %v729, 0
    %878 = vmatprep.subr.bf16.mxu0 0
    %879 = vmatpush1.bf16.msra.mxu0 0
    %880 = vmatprep.subr.bf16.mxu0 0
    %881 = vmatpush1.bf16.msra.mxu0 0
    %882 = vmatprep.subr.bf16.mxu0 0
    %883 = vmatpush1.bf16.msra.mxu0 0
    %884 = vmatprep.subr.bf16.mxu0 0
    %885 = vmatpush1.bf16.msra.mxu0 0
    %886 = vmatprep.subr.bf16.mxu0 0
    %887 = vmatpush1.bf16.msra.mxu0 0
    %888 = vmatprep.subr.bf16.mxu0 0
    %889 = vmatpush1.bf16.msra.mxu0 0
    %890 = vmatprep.subr.bf16.mxu0 0
    %891 = vmatpush1.bf16.msra.mxu0 0
    %892 = vmatprep.subr.bf16.mxu0 0
    %893 = vmatpush1.bf16.msra.mxu0 %v876
    %894 = vmatprep.subr.bf16.mxu0 0
    %895 = vmatpush2.bf16.msra.mxu0 0
    %896 = vmatprep.subr.bf16.mxu0 0
    %897 = vmatpush2.bf16.msra.mxu0 0
    %898 = vmatprep.subr.bf16.mxu0 0
    %899 = vmatpush2.bf16.msra.mxu0 0
    %900 = vmatprep.subr.bf16.mxu0 0
    %901 = vmatpush2.bf16.msra.mxu0 0
    %902 = vmatprep.subr.bf16.mxu0 0
    %903 = vmatpush2.bf16.msra.mxu0 0
    %904 = vmatprep.subr.bf16.mxu0 0
    %905 = vmatpush2.bf16.msra.mxu0 0
    %906 = vmatprep.subr.bf16.mxu0 0
    %907 = vmatpush2.bf16.msra.mxu0 0
    %908 = vmatprep.subr.bf16.mxu0 0
    %909 = vmatpush2.bf16.msra.mxu0 0
    %910 = vmatprep.mubr.bf16.mxu0 0
    %911 = vmatmul.mubr.bf16.gmra.mxu0 %v873
    %v912 = vpop.f32.mrf.mxu0
    %v913 = vadd.f32 0.0, %v912
    %v914 = vpop.f32.mrf.mxu0
    %v915 = vpop.f32.mrf.mxu0
    %v916 = vadd.f32 0.0, %v915
    %v917 = vpop.f32.mrf.mxu0
    %918 = vdwg.mxu0
    %v919 = vsel %vm78, %v772, 0.0
    %v920 = vsel %vm78, %v819, 0.0
    %v921 = vadd.f32 %v919, %v920
    %v922 = vsel %vm78, %v866, 0.0
    %v923 = vadd.f32 %v921, %v922
    %v924 = vsel %vm78, %v913, 0.0
    %v925 = vadd.f32 %v923, %v924
    %v926 = vsel %vm78, %v775, 0.0
    %v927 = vsel %vm78, %v822, 0.0
    %v928 = vadd.f32 %v926, %v927
    %v929 = vsel %vm78, %v869, 0.0
    %v930 = vadd.f32 %v928, %v929
    %v931 = vsel %vm78, %v916, 0.0
    %v932 = vadd.f32 %v930, %v931
    %v933 = vadd.f32 %v74, %v925
    %v934 = vadd.f32 %v75, %v932
    %v935 = vld [vmem:[%s7] sm:$0x1]
    %v937 = vlaneseq
    %v938 = vshrl.u32 %v937, 7
    %v939 = vsub.s32 0, %v938
    %v940 = vrot.slane %v935, %v939
    %v942 = vadd.f32 %v933, %v940
    %v943 = vadd.f32 %v934, %v940
    %v944 = vld [vmem:[%s8] sm:$0x1]
    %v945 = vld [vmem:[%s9] sm:$0x1]
    %v946 = vsel %vm78, %v942, 0.0
    %947 = vadd.xlane.f32.xlu0 %v946
    %v948 = vpop.xlane.xlu0 %947
    %v949 = vsel %vm78, %v943, 0.0
    %950 = vadd.xlane.f32.xlu0 %v949
    %v951 = vpop.xlane.xlu0 %950
    %v952 = vmul.f32 %v948, %v85
    %v953 = vmul.f32 %v951, %v85
    %v954 = vsub.f32 %v942, %v952
    %v955 = vsub.f32 %v943, %v953
    %v956 = vmul.f32 %v954, %v954
    %v957 = vmul.f32 %v955, %v955
    %v958 = vsel %vm78, %v956, 0.0
    %959 = vadd.xlane.f32.xlu0 %v958
    %v960 = vpop.xlane.xlu0 %959
    %v961 = vsel %vm78, %v957, 0.0
    %962 = vadd.xlane.f32.xlu0 %v961
    %v963 = vpop.xlane.xlu0 %962
    %v964 = vmul.f32 %v960, %v85
    %v965 = vmul.f32 %v963, %v85
    %v966 = vadd.f32 %v964, 1e-05
    %v967 = vadd.f32 %v965, 1e-05
    %v968 = vrsqrt.pop %v966
    %v969 = vrsqrt.pop %v967
    %v970 = vmul.f32 %v954, %v968
    %v971 = vmul.f32 %v955, %v969
    %v973 = vlaneseq
    %v974 = vshrl.u32 %v973, 7
    %v975 = vsub.s32 0, %v974
    %v976 = vrot.slane %v944, %v975
    %v978 = vmul.f32 %v970, %v976
    %v979 = vmul.f32 %v971, %v976
    %v981 = vlaneseq
    %v982 = vshrl.u32 %v981, 7
    %v983 = vsub.s32 0, %v982
    %v984 = vrot.slane %v945, %v983
    %v986 = vadd.f32 %v978, %v984
    %v987 = vadd.f32 %v979, %v984
    %v988 = vpack.c.bf16 %v987, %v986
    %v989 = vld [vmem:[%s10] sm:$0xf]
    %v990 = vld [vmem:[%s10 + $0x4] sm:$0xf]
    %v991 = vld [vmem:[%s10 + $0x8] sm:$0xf]
    %v992 = vld [vmem:[%s10 + $0xc] sm:$0xf]
    %v993 = vld [vmem:[%s11] sm:$0x1]
    %v995 = vlaneseq
    %v996 = vshrl.u32 %v995, 7
    %v997 = vsub.s32 0, %v996
    %v998 = vrot.slane %v993, %v997
    %v1004 = vunpack.c.l.b16 %v989
    %v1005 = vunpack.c.l.b16 %v990
    %v1006 = vunpack.c.l.b16 %v991
    %v1007 = vunpack.c.l.b16 %v992
    %v1008 = vpack.c.b16 %v1005, %v1004
    %v1009 = vpack.c.b16 %v1007, %v1006
    %v1013 = vsel %vm78, %v988, 0
    %1015 = vmatprep.subr.bf16.mxu0 0
    %1016 = vmatpush1.bf16.msra.mxu0 0
    %1017 = vmatprep.subr.bf16.mxu0 0
    %1018 = vmatpush1.bf16.msra.mxu0 0
    %1019 = vmatprep.subr.bf16.mxu0 0
    %1020 = vmatpush1.bf16.msra.mxu0 0
    %1021 = vmatprep.subr.bf16.mxu0 0
    %1022 = vmatpush1.bf16.msra.mxu0 0
    %1023 = vmatprep.subr.bf16.mxu0 0
    %1024 = vmatpush1.bf16.msra.mxu0 0
    %1025 = vmatprep.subr.bf16.mxu0 0
    %1026 = vmatpush1.bf16.msra.mxu0 0
    %1027 = vmatprep.subr.bf16.mxu0 0
    %1028 = vmatpush1.bf16.msra.mxu0 %v1009
    %1029 = vmatprep.subr.bf16.mxu0 0
    %1030 = vmatpush1.bf16.msra.mxu0 %v1008
    %1031 = vmatprep.subr.bf16.mxu0 0
    %1032 = vmatpush2.bf16.msra.mxu0 0
    %1033 = vmatprep.subr.bf16.mxu0 0
    %1034 = vmatpush2.bf16.msra.mxu0 0
    %1035 = vmatprep.subr.bf16.mxu0 0
    %1036 = vmatpush2.bf16.msra.mxu0 0
    %1037 = vmatprep.subr.bf16.mxu0 0
    %1038 = vmatpush2.bf16.msra.mxu0 0
    %1039 = vmatprep.subr.bf16.mxu0 0
    %1040 = vmatpush2.bf16.msra.mxu0 0
    %1041 = vmatprep.subr.bf16.mxu0 0
    %1042 = vmatpush2.bf16.msra.mxu0 0
    %1043 = vmatprep.subr.bf16.mxu0 0
    %1044 = vmatpush2.bf16.msra.mxu0 0
    %1045 = vmatprep.subr.bf16.mxu0 0
    %1046 = vmatpush2.bf16.msra.mxu0 0
    %1047 = vmatprep.mubr.bf16.mxu0 0
    %1048 = vmatmul.mubr.bf16.gmra.mxu0 %v1013
    %v1049 = vpop.f32.mrf.mxu0
    %v1050 = vadd.f32 %v998, %v1049
    %v1051 = vpop.f32.mrf.mxu0
    %v1052 = vpop.f32.mrf.mxu0
    %v1053 = vadd.f32 %v998, %v1052
    %v1054 = vpop.f32.mrf.mxu0
    %1055 = vdwg.mxu0
    %v1056 = vmul.f32 %v1050, -1.702
    %v1057 = vmul.f32 %v1053, -1.702
    %v1058 = vmul.f32 %v1056, 1.442695
    %v1059 = vpow.pop %v1058
    %v1060 = vmul.f32 %v1057, 1.442695
    %v1061 = vpow.pop %v1060
    %v1062 = vadd.f32 %v1059, 1.0
    %v1063 = vadd.f32 %v1061, 1.0
    %v1064 = vrcp.pop %v1062
    %v1065 = vmul.f32 1.0, %v1064
    %v1066 = vrcp.pop %v1063
    %v1067 = vmul.f32 1.0, %v1066
    %v1068 = vmul.f32 %v1050, %v1065
    %v1069 = vmul.f32 %v1053, %v1067
    %v1070 = vpack.c.bf16 %v1069, %v1068
    %v1071 = vld [vmem:[%s12] sm:$0xf]
    %v1072 = vld [vmem:[%s12 + $0x4] sm:$0xf]
    %v1073 = vld [vmem:[%s12 + $0x8] sm:$0xf]
    %v1074 = vld [vmem:[%s12 + $0xc] sm:$0xf]
    %v1075 = vld [vmem:[%s12 + $0x10] sm:$0xf]
    %v1076 = vld [vmem:[%s12 + $0x14] sm:$0xf]
    %v1077 = vld [vmem:[%s12 + $0x18] sm:$0xf]
    %v1078 = vld [vmem:[%s12 + $0x1c] sm:$0xf]
    %v1079 = vld [vmem:[%s12 + $0x20] sm:$0xf]
    %v1080 = vld [vmem:[%s12 + $0x24] sm:$0xf]
    %v1081 = vld [vmem:[%s12 + $0x28] sm:$0xf]
    %v1082 = vld [vmem:[%s12 + $0x2c] sm:$0xf]
    %v1083 = vld [vmem:[%s12 + $0x30] sm:$0xf]
    %v1084 = vld [vmem:[%s12 + $0x34] sm:$0xf]
    %v1085 = vld [vmem:[%s12 + $0x38] sm:$0xf]
    %v1086 = vld [vmem:[%s12 + $0x3c] sm:$0xf]
    %v1087 = vld [vmem:[%s13] sm:$0x1]
    %v1089 = vlaneseq
    %v1090 = vshrl.u32 %v1089, 7
    %v1091 = vsub.s32 0, %v1090
    %v1092 = vrot.slane %v1087, %v1091
    %v1110 = vunpack.c.l.b16 %v1071
    %v1111 = vunpack.c.l.b16 %v1072
    %v1112 = vunpack.c.l.b16 %v1073
    %v1113 = vunpack.c.l.b16 %v1074
    %v1114 = vunpack.c.l.b16 %v1075
    %v1115 = vunpack.c.l.b16 %v1076
    %v1116 = vunpack.c.l.b16 %v1077
    %v1117 = vunpack.c.l.b16 %v1078
    %v1118 = vunpack.c.l.b16 %v1079
    %v1119 = vunpack.c.l.b16 %v1080
    %v1120 = vunpack.c.l.b16 %v1081
    %v1121 = vunpack.c.l.b16 %v1082
    %v1122 = vunpack.c.l.b16 %v1083
    %v1123 = vunpack.c.l.b16 %v1084
    %v1124 = vunpack.c.l.b16 %v1085
    %v1125 = vunpack.c.l.b16 %v1086
    %v1126 = vpack.c.b16 %v1111, %v1110
    %v1127 = vpack.c.b16 %v1113, %v1112
    %v1128 = vpack.c.b16 %v1115, %v1114
    %v1129 = vpack.c.b16 %v1117, %v1116
    %v1130 = vpack.c.b16 %v1119, %v1118
    %v1131 = vpack.c.b16 %v1121, %v1120
    %v1132 = vpack.c.b16 %v1123, %v1122
    %v1133 = vpack.c.b16 %v1125, %v1124
    %1142 = vmatprep.subr.bf16.mxu0 0
    %1143 = vmatpush1.bf16.msra.mxu0 %v1133
    %1144 = vmatprep.subr.bf16.mxu0 0
    %1145 = vmatpush1.bf16.msra.mxu0 %v1132
    %1146 = vmatprep.subr.bf16.mxu0 0
    %1147 = vmatpush1.bf16.msra.mxu0 %v1131
    %1148 = vmatprep.subr.bf16.mxu0 0
    %1149 = vmatpush1.bf16.msra.mxu0 %v1130
    %1150 = vmatprep.subr.bf16.mxu0 0
    %1151 = vmatpush1.bf16.msra.mxu0 %v1129
    %1152 = vmatprep.subr.bf16.mxu0 0
    %1153 = vmatpush1.bf16.msra.mxu0 %v1128
    %1154 = vmatprep.subr.bf16.mxu0 0
    %1155 = vmatpush1.bf16.msra.mxu0 %v1127
    %1156 = vmatprep.subr.bf16.mxu0 0
    %1157 = vmatpush1.bf16.msra.mxu0 %v1126
    %1158 = vmatprep.subr.bf16.mxu0 0
    %1159 = vmatpush2.bf16.msra.mxu0 0
    %1160 = vmatprep.subr.bf16.mxu0 0
    %1161 = vmatpush2.bf16.msra.mxu0 0
    %1162 = vmatprep.subr.bf16.mxu0 0
    %1163 = vmatpush2.bf16.msra.mxu0 0
    %1164 = vmatprep.subr.bf16.mxu0 0
    %1165 = vmatpush2.bf16.msra.mxu0 0
    %1166 = vmatprep.subr.bf16.mxu0 0
    %1167 = vmatpush2.bf16.msra.mxu0 0
    %1168 = vmatprep.subr.bf16.mxu0 0
    %1169 = vmatpush2.bf16.msra.mxu0 0
    %1170 = vmatprep.subr.bf16.mxu0 0
    %1171 = vmatpush2.bf16.msra.mxu0 0
    %1172 = vmatprep.subr.bf16.mxu0 0
    %1173 = vmatpush2.bf16.msra.mxu0 0
    %1174 = vmatprep.mubr.bf16.mxu0 0
    %1175 = vmatmul.mubr.bf16.gmra.mxu0 %v1070
    %v1176 = vpop.f32.mrf.mxu0
    %v1177 = vadd.f32 %v1092, %v1176
    %v1178 = vpop.f32.mrf.mxu0
    %v1179 = vpop.f32.mrf.mxu0
    %v1180 = vadd.f32 %v1092, %v1179
    %v1181 = vpop.f32.mrf.mxu0
    %1182 = vdwg.mxu0
    %v1183 = vadd.f32 %v942, %v1177
    %v1184 = vadd.f32 %v943, %v1180
    %s1185 = scalar_lea.vmem %s2, 1
    %v1186 = vld [vmem:[%s1185] sm:$0x1]
    %s1187 = scalar_lea.vmem %s3, 1
    %v1188 = vld [vmem:[%s1187] sm:$0x1]
    %v1189 = vsel %vm78, %v1183, 0.0
    %1190 = vadd.xlane.f32.xlu0 %v1189
    %v1191 = vpop.xlane.xlu0 %1190
    %v1192 = vsel %vm78, %v1184, 0.0
    %1193 = vadd.xlane.f32.xlu0 %v1192
    %v1194 = vpop.xlane.xlu0 %1193
    %v1195 = vmul.f32 %v1191, %v85
    %v1196 = vmul.f32 %v1194, %v85
    %v1197 = vsub.f32 %v1183, %v1195
    %v1198 = vsub.f32 %v1184, %v1196
    %v1199 = vmul.f32 %v1197, %v1197
    %v1200 = vmul.f32 %v1198, %v1198
    %v1201 = vsel %vm78, %v1199, 0.0
    %1202 = vadd.xlane.f32.xlu0 %v1201
    %v1203 = vpop.xlane.xlu0 %1202
    %v1204 = vsel %vm78, %v1200, 0.0
    %1205 = vadd.xlane.f32.xlu0 %v1204
    %v1206 = vpop.xlane.xlu0 %1205
    %v1207 = vmul.f32 %v1203, %v85
    %v1208 = vmul.f32 %v1206, %v85
    %v1209 = vadd.f32 %v1207, 1e-05
    %v1210 = vadd.f32 %v1208, 1e-05
    %v1211 = vrsqrt.pop %v1209
    %v1212 = vrsqrt.pop %v1210
    %v1213 = vmul.f32 %v1197, %v1211
    %v1214 = vmul.f32 %v1198, %v1212
    %v1216 = vlaneseq
    %v1217 = vshrl.u32 %v1216, 7
    %v1218 = vsub.s32 0, %v1217
    %v1219 = vrot.slane %v1186, %v1218
    %v1221 = vmul.f32 %v1213, %v1219
    %v1222 = vmul.f32 %v1214, %v1219
    %v1224 = vlaneseq
    %v1225 = vshrl.u32 %v1224, 7
    %v1226 = vsub.s32 0, %v1225
    %v1227 = vrot.slane %v1188, %v1226
    %v1229 = vadd.f32 %v1221, %v1227
    %v1230 = vadd.f32 %v1222, %v1227
    %v1231 = vpack.c.bf16 %v1230, %v1229
    %s1232 = scalar_lea.vmem %s4, 16
    %v1233 = vld [vmem:[%s1232] sm:$0xf]
    %v1234 = vld [vmem:[%s1232 + $0x4] sm:$0xf]
    %v1235 = vld [vmem:[%s1232 + $0x8] sm:$0xf]
    %v1236 = vld [vmem:[%s1232 + $0xc] sm:$0xf]
    %s1237 = scalar_lea.vmem %s5, 1
    %v1238 = vld [vmem:[%s1237] sm:$0x1]
    %v1240 = vlaneseq
    %v1241 = vshrl.u32 %v1240, 7
    %v1242 = vsub.s32 0, %v1241
    %v1243 = vrot.slane %v1238, %v1242
    %v1249 = vunpack.c.l.b16 %v1233
    %v1250 = vunpack.c.l.b16 %v1234
    %v1251 = vunpack.c.l.b16 %v1235
    %v1252 = vunpack.c.l.b16 %v1236
    %v1253 = vpack.c.b16 %v1250, %v1249
    %v1254 = vpack.c.b16 %v1252, %v1251
    %v1258 = vsel %vm78, %v1231, 0
    %1260 = vmatprep.subr.bf16.mxu0 0
    %1261 = vmatpush1.bf16.msra.mxu0 0
    %1262 = vmatprep.subr.bf16.mxu0 0
    %1263 = vmatpush1.bf16.msra.mxu0 0
    %1264 = vmatprep.subr.bf16.mxu0 0
    %1265 = vmatpush1.bf16.msra.mxu0 0
    %1266 = vmatprep.subr.bf16.mxu0 0
    %1267 = vmatpush1.bf16.msra.mxu0 0
    %1268 = vmatprep.subr.bf16.mxu0 0
    %1269 = vmatpush1.bf16.msra.mxu0 0
    %1270 = vmatprep.subr.bf16.mxu0 0
    %1271 = vmatpush1.bf16.msra.mxu0 0
    %1272 = vmatprep.subr.bf16.mxu0 0
    %1273 = vmatpush1.bf16.msra.mxu0 %v1254
    %1274 = vmatprep.subr.bf16.mxu0 0
    %1275 = vmatpush1.bf16.msra.mxu0 %v1253
    %1276 = vmatprep.subr.bf16.mxu0 0
    %1277 = vmatpush2.bf16.msra.mxu0 0
    %1278 = vmatprep.subr.bf16.mxu0 0
    %1279 = vmatpush2.bf16.msra.mxu0 0
    %1280 = vmatprep.subr.bf16.mxu0 0
    %1281 = vmatpush2.bf16.msra.mxu0 0
    %1282 = vmatprep.subr.bf16.mxu0 0
    %1283 = vmatpush2.bf16.msra.mxu0 0
    %1284 = vmatprep.subr.bf16.mxu0 0
    %1285 = vmatpush2.bf16.msra.mxu0 0
    %1286 = vmatprep.subr.bf16.mxu0 0
    %1287 = vmatpush2.bf16.msra.mxu0 0
    %1288 = vmatprep.subr.bf16.mxu0 0
    %1289 = vmatpush2.bf16.msra.mxu0 0
    %1290 = vmatprep.subr.bf16.mxu0 0
    %1291 = vmatpush2.bf16.msra.mxu0 0
    %1292 = vmatprep.mubr.bf16.mxu0 0
    %1293 = vmatmul.mubr.bf16.gmra.mxu0 %v1258
    %v1294 = vpop.f32.mrf.mxu0
    %v1295 = vadd.f32 %v1243, %v1294
    %v1296 = vpop.f32.mrf.mxu0
    %v1297 = vpop.f32.mrf.mxu0
    %v1298 = vadd.f32 %v1243, %v1297
    %v1299 = vpop.f32.mrf.mxu0
    %1300 = vdwg.mxu0
    %v1301 = vmul.f32 %v1295, 0.35355338
    %v1302 = vmul.f32 %v1298, 0.35355338
    %1305 = vrot.lane.b32.xlu0 %v1301, 120
    %v1306 = vpop.permute.xlu0 %1305
    %1307 = vrot.lane.b32.xlu0 %v1302, 120
    %v1308 = vpop.permute.xlu0 %1307
    %1311 = vrot.lane.b32.xlu0 %v1301, 112
    %v1312 = vpop.permute.xlu0 %1311
    %1313 = vrot.lane.b32.xlu0 %v1302, 112
    %v1314 = vpop.permute.xlu0 %1313
    %1317 = vrot.lane.b32.xlu0 %v1301, 104
    %v1318 = vpop.permute.xlu0 %1317
    %1319 = vrot.lane.b32.xlu0 %v1302, 104
    %v1320 = vpop.permute.xlu0 %1319
    %v1323 = vpack.c.bf16 %v1302, %v1301
    %v1324 = vpack.c.bf16 %v1308, %v1306
    %v1325 = vpack.c.bf16 %v1314, %v1312
    %v1326 = vpack.c.bf16 %v1320, %v1318
    %1329 = vrot.lane.b32.xlu0 %v1295, 120
    %v1330 = vpop.permute.xlu0 %1329
    %1331 = vrot.lane.b32.xlu0 %v1298, 120
    %v1332 = vpop.permute.xlu0 %1331
    %1335 = vrot.lane.b32.xlu0 %v1295, 112
    %v1336 = vpop.permute.xlu0 %1335
    %1337 = vrot.lane.b32.xlu0 %v1298, 112
    %v1338 = vpop.permute.xlu0 %1337
    %1341 = vrot.lane.b32.xlu0 %v1295, 104
    %v1342 = vpop.permute.xlu0 %1341
    %1343 = vrot.lane.b32.xlu0 %v1298, 104
    %v1344 = vpop.permute.xlu0 %1343
    %v1347 = vpack.c.bf16 %v1298, %v1295
    %v1348 = vpack.c.bf16 %v1332, %v1330
    %v1349 = vpack.c.bf16 %v1338, %v1336
    %v1350 = vpack.c.bf16 %v1344, %v1342
    %1352 = vrot.lane.b32.xlu0 %v1347, 96
    %v1353 = vpop.permute.xlu0 %1352
    %v1355 = vsel %vm243, %v1323, 0
    %v1358 = vsel %vm243, %v1353, 0
    %1360 = vmatprep.subr.bf16.mxu0 0
    %1361 = vmatpush1.bf16.xpose.msra.mxu0 0
    %1362 = vmatprep.subr.bf16.mxu0 0
    %1363 = vmatpush1.bf16.xpose.msra.mxu0 0
    %1364 = vmatprep.subr.bf16.mxu0 0
    %1365 = vmatpush1.bf16.xpose.msra.mxu0 0
    %1366 = vmatprep.subr.bf16.mxu0 0
    %1367 = vmatpush1.bf16.xpose.msra.mxu0 0
    %1368 = vmatprep.subr.bf16.mxu0 0
    %1369 = vmatpush1.bf16.xpose.msra.mxu0 0
    %1370 = vmatprep.subr.bf16.mxu0 0
    %1371 = vmatpush1.bf16.xpose.msra.mxu0 0
    %1372 = vmatprep.subr.bf16.mxu0 0
    %1373 = vmatpush1.bf16.xpose.msra.mxu0 0
    %1374 = vmatprep.subr.bf16.mxu0 0
    %1375 = vmatpush1.bf16.xpose.msra.mxu0 %v1358
    %1376 = vmatprep.subr.bf16.mxu0 0
    %1377 = vmatpush2.bf16.xpose.msra.mxu0 0
    %1378 = vmatprep.subr.bf16.mxu0 0
    %1379 = vmatpush2.bf16.xpose.msra.mxu0 0
    %1380 = vmatprep.subr.bf16.mxu0 0
    %1381 = vmatpush2.bf16.xpose.msra.mxu0 0
    %1382 = vmatprep.subr.bf16.mxu0 0
    %1383 = vmatpush2.bf16.xpose.msra.mxu0 0
    %1384 = vmatprep.subr.bf16.mxu0 0
    %1385 = vmatpush2.bf16.xpose.msra.mxu0 0
    %1386 = vmatprep.subr.bf16.mxu0 0
    %1387 = vmatpush2.bf16.xpose.msra.mxu0 0
    %1388 = vmatprep.subr.bf16.mxu0 0
    %1389 = vmatpush2.bf16.xpose.msra.mxu0 0
    %1390 = vmatprep.subr.bf16.mxu0 0
    %1391 = vmatpush2.bf16.xpose.msra.mxu0 0
    %1392 = vmatprep.mubr.bf16.mxu0 0
    %1393 = vmatmul.mubr.bf16.gmra.mxu0 %v1355
    %v1394 = vpop.f32.mrf.mxu0
    %v1395 = vadd.f32 %v72, %v1394
    %v1396 = vpop.f32.mrf.mxu0
    %v1397 = vpop.f32.mrf.mxu0
    %v1398 = vadd.f32 %v73, %v1397
    %v1399 = vpop.f32.mrf.mxu0
    %1400 = vdwg.mxu0
    %1402 = vrot.lane.b32.xlu0 %v1348, 96
    %v1403 = vpop.permute.xlu0 %1402
    %v1405 = vsel %vm243, %v1324, 0
    %v1408 = vsel %vm243, %v1403, 0
    %1410 = vmatprep.subr.bf16.mxu0 0
    %1411 = vmatpush1.bf16.xpose.msra.mxu0 0
    %1412 = vmatprep.subr.bf16.mxu0 0
    %1413 = vmatpush1.bf16.xpose.msra.mxu0 0
    %1414 = vmatprep.subr.bf16.mxu0 0
    %1415 = vmatpush1.bf16.xpose.msra.mxu0 0
    %1416 = vmatprep.subr.bf16.mxu0 0
    %1417 = vmatpush1.bf16.xpose.msra.mxu0 0
    %1418 = vmatprep.subr.bf16.mxu0 0
    %1419 = vmatpush1.bf16.xpose.msra.mxu0 0
    %1420 = vmatprep.subr.bf16.mxu0 0
    %1421 = vmatpush1.bf16.xpose.msra.mxu0 0
    %1422 = vmatprep.subr.bf16.mxu0 0
    %1423 = vmatpush1.bf16.xpose.msra.mxu0 0
    %1424 = vmatprep.subr.bf16.mxu0 0
    %1425 = vmatpush1.bf16.xpose.msra.mxu0 %v1408
    %1426 = vmatprep.subr.bf16.mxu0 0
    %1427 = vmatpush2.bf16.xpose.msra.mxu0 0
    %1428 = vmatprep.subr.bf16.mxu0 0
    %1429 = vmatpush2.bf16.xpose.msra.mxu0 0
    %1430 = vmatprep.subr.bf16.mxu0 0
    %1431 = vmatpush2.bf16.xpose.msra.mxu0 0
    %1432 = vmatprep.subr.bf16.mxu0 0
    %1433 = vmatpush2.bf16.xpose.msra.mxu0 0
    %1434 = vmatprep.subr.bf16.mxu0 0
    %1435 = vmatpush2.bf16.xpose.msra.mxu0 0
    %1436 = vmatprep.subr.bf16.mxu0 0
    %1437 = vmatpush2.bf16.xpose.msra.mxu0 0
    %1438 = vmatprep.subr.bf16.mxu0 0
    %1439 = vmatpush2.bf16.xpose.msra.mxu0 0
    %1440 = vmatprep.subr.bf16.mxu0 0
    %1441 = vmatpush2.bf16.xpose.msra.mxu0 0
    %1442 = vmatprep.mubr.bf16.mxu0 0
    %1443 = vmatmul.mubr.bf16.gmra.mxu0 %v1405
    %v1444 = vpop.f32.mrf.mxu0
    %v1445 = vadd.f32 %v72, %v1444
    %v1446 = vpop.f32.mrf.mxu0
    %v1447 = vpop.f32.mrf.mxu0
    %v1448 = vadd.f32 %v73, %v1447
    %v1449 = vpop.f32.mrf.mxu0
    %1450 = vdwg.mxu0
    %1452 = vrot.lane.b32.xlu0 %v1349, 96
    %v1453 = vpop.permute.xlu0 %1452
    %v1455 = vsel %vm243, %v1325, 0
    %v1458 = vsel %vm243, %v1453, 0
    %1460 = vmatprep.subr.bf16.mxu0 0
    %1461 = vmatpush1.bf16.xpose.msra.mxu0 0
    %1462 = vmatprep.subr.bf16.mxu0 0
    %1463 = vmatpush1.bf16.xpose.msra.mxu0 0
    %1464 = vmatprep.subr.bf16.mxu0 0
    %1465 = vmatpush1.bf16.xpose.msra.mxu0 0
    %1466 = vmatprep.subr.bf16.mxu0 0
    %1467 = vmatpush1.bf16.xpose.msra.mxu0 0
    %1468 = vmatprep.subr.bf16.mxu0 0
    %1469 = vmatpush1.bf16.xpose.msra.mxu0 0
    %1470 = vmatprep.subr.bf16.mxu0 0
    %1471 = vmatpush1.bf16.xpose.msra.mxu0 0
    %1472 = vmatprep.subr.bf16.mxu0 0
    %1473 = vmatpush1.bf16.xpose.msra.mxu0 0
    %1474 = vmatprep.subr.bf16.mxu0 0
    %1475 = vmatpush1.bf16.xpose.msra.mxu0 %v1458
    %1476 = vmatprep.subr.bf16.mxu0 0
    %1477 = vmatpush2.bf16.xpose.msra.mxu0 0
    %1478 = vmatprep.subr.bf16.mxu0 0
    %1479 = vmatpush2.bf16.xpose.msra.mxu0 0
    %1480 = vmatprep.subr.bf16.mxu0 0
    %1481 = vmatpush2.bf16.xpose.msra.mxu0 0
    %1482 = vmatprep.subr.bf16.mxu0 0
    %1483 = vmatpush2.bf16.xpose.msra.mxu0 0
    %1484 = vmatprep.subr.bf16.mxu0 0
    %1485 = vmatpush2.bf16.xpose.msra.mxu0 0
    %1486 = vmatprep.subr.bf16.mxu0 0
    %1487 = vmatpush2.bf16.xpose.msra.mxu0 0
    %1488 = vmatprep.subr.bf16.mxu0 0
    %1489 = vmatpush2.bf16.xpose.msra.mxu0 0
    %1490 = vmatprep.subr.bf16.mxu0 0
    %1491 = vmatpush2.bf16.xpose.msra.mxu0 0
    %1492 = vmatprep.mubr.bf16.mxu0 0
    %1493 = vmatmul.mubr.bf16.gmra.mxu0 %v1455
    %v1494 = vpop.f32.mrf.mxu0
    %v1495 = vadd.f32 %v72, %v1494
    %v1496 = vpop.f32.mrf.mxu0
    %v1497 = vpop.f32.mrf.mxu0
    %v1498 = vadd.f32 %v73, %v1497
    %v1499 = vpop.f32.mrf.mxu0
    %1500 = vdwg.mxu0
    %1502 = vrot.lane.b32.xlu0 %v1350, 96
    %v1503 = vpop.permute.xlu0 %1502
    %v1505 = vsel %vm243, %v1326, 0
    %v1508 = vsel %vm243, %v1503, 0
    %1510 = vmatprep.subr.bf16.mxu0 0
    %1511 = vmatpush1.bf16.xpose.msra.mxu0 0
    %1512 = vmatprep.subr.bf16.mxu0 0
    %1513 = vmatpush1.bf16.xpose.msra.mxu0 0
    %1514 = vmatprep.subr.bf16.mxu0 0
    %1515 = vmatpush1.bf16.xpose.msra.mxu0 0
    %1516 = vmatprep.subr.bf16.mxu0 0
    %1517 = vmatpush1.bf16.xpose.msra.mxu0 0
    %1518 = vmatprep.subr.bf16.mxu0 0
    %1519 = vmatpush1.bf16.xpose.msra.mxu0 0
    %1520 = vmatprep.subr.bf16.mxu0 0
    %1521 = vmatpush1.bf16.xpose.msra.mxu0 0
    %1522 = vmatprep.subr.bf16.mxu0 0
    %1523 = vmatpush1.bf16.xpose.msra.mxu0 0
    %1524 = vmatprep.subr.bf16.mxu0 0
    %1525 = vmatpush1.bf16.xpose.msra.mxu0 %v1508
    %1526 = vmatprep.subr.bf16.mxu0 0
    %1527 = vmatpush2.bf16.xpose.msra.mxu0 0
    %1528 = vmatprep.subr.bf16.mxu0 0
    %1529 = vmatpush2.bf16.xpose.msra.mxu0 0
    %1530 = vmatprep.subr.bf16.mxu0 0
    %1531 = vmatpush2.bf16.xpose.msra.mxu0 0
    %1532 = vmatprep.subr.bf16.mxu0 0
    %1533 = vmatpush2.bf16.xpose.msra.mxu0 0
    %1534 = vmatprep.subr.bf16.mxu0 0
    %1535 = vmatpush2.bf16.xpose.msra.mxu0 0
    %1536 = vmatprep.subr.bf16.mxu0 0
    %1537 = vmatpush2.bf16.xpose.msra.mxu0 0
    %1538 = vmatprep.subr.bf16.mxu0 0
    %1539 = vmatpush2.bf16.xpose.msra.mxu0 0
    %1540 = vmatprep.subr.bf16.mxu0 0
    %1541 = vmatpush2.bf16.xpose.msra.mxu0 0
    %1542 = vmatprep.mubr.bf16.mxu0 0
    %1543 = vmatmul.mubr.bf16.gmra.mxu0 %v1505
    %v1544 = vpop.f32.mrf.mxu0
    %v1545 = vadd.f32 %v72, %v1544
    %v1546 = vpop.f32.mrf.mxu0
    %v1547 = vpop.f32.mrf.mxu0
    %v1548 = vadd.f32 %v73, %v1547
    %v1549 = vpop.f32.mrf.mxu0
    %1550 = vdwg.mxu0
    %v1551 = vsel %vm441, %v1395, -inf
    %1552 = vmax.xlane.f32.xlu0 %v1551
    %v1553 = vpop.xlane.xlu0 %1552
    %v1554 = vsel %vm441, %v1398, -inf
    %1555 = vmax.xlane.f32.xlu0 %v1554
    %v1556 = vpop.xlane.xlu0 %1555
    %v1557 = vsel %vm441, %v1445, -inf
    %1558 = vmax.xlane.f32.xlu0 %v1557
    %v1559 = vpop.xlane.xlu0 %1558
    %v1560 = vsel %vm441, %v1448, -inf
    %1561 = vmax.xlane.f32.xlu0 %v1560
    %v1562 = vpop.xlane.xlu0 %1561
    %v1563 = vsel %vm441, %v1495, -inf
    %1564 = vmax.xlane.f32.xlu0 %v1563
    %v1565 = vpop.xlane.xlu0 %1564
    %v1566 = vsel %vm441, %v1498, -inf
    %1567 = vmax.xlane.f32.xlu0 %v1566
    %v1568 = vpop.xlane.xlu0 %1567
    %v1569 = vsel %vm441, %v1545, -inf
    %1570 = vmax.xlane.f32.xlu0 %v1569
    %v1571 = vpop.xlane.xlu0 %1570
    %v1572 = vsel %vm441, %v1548, -inf
    %1573 = vmax.xlane.f32.xlu0 %v1572
    %v1574 = vpop.xlane.xlu0 %1573
    %v1575 = vsub.f32 %v1395, %v1553
    %v1576 = vsub.f32 %v1398, %v1556
    %v1577 = vsub.f32 %v1445, %v1559
    %v1578 = vsub.f32 %v1448, %v1562
    %v1579 = vsub.f32 %v1495, %v1565
    %v1580 = vsub.f32 %v1498, %v1568
    %v1581 = vsub.f32 %v1545, %v1571
    %v1582 = vsub.f32 %v1548, %v1574
    %v1583 = vmul.f32 %v1575, 1.442695
    %v1584 = vpow.pop %v1583
    %v1585 = vmul.f32 %v1576, 1.442695
    %v1586 = vpow.pop %v1585
    %v1587 = vmul.f32 %v1577, 1.442695
    %v1588 = vpow.pop %v1587
    %v1589 = vmul.f32 %v1578, 1.442695
    %v1590 = vpow.pop %v1589
    %v1591 = vmul.f32 %v1579, 1.442695
    %v1592 = vpow.pop %v1591
    %v1593 = vmul.f32 %v1580, 1.442695
    %v1594 = vpow.pop %v1593
    %v1595 = vmul.f32 %v1581, 1.442695
    %v1596 = vpow.pop %v1595
    %v1597 = vmul.f32 %v1582, 1.442695
    %v1598 = vpow.pop %v1597
    %v1599 = vsel %vm441, %v1584, 0.0
    %1600 = vadd.xlane.f32.xlu0 %v1599
    %v1601 = vpop.xlane.xlu0 %1600
    %v1602 = vsel %vm441, %v1586, 0.0
    %1603 = vadd.xlane.f32.xlu0 %v1602
    %v1604 = vpop.xlane.xlu0 %1603
    %v1605 = vsel %vm441, %v1588, 0.0
    %1606 = vadd.xlane.f32.xlu0 %v1605
    %v1607 = vpop.xlane.xlu0 %1606
    %v1608 = vsel %vm441, %v1590, 0.0
    %1609 = vadd.xlane.f32.xlu0 %v1608
    %v1610 = vpop.xlane.xlu0 %1609
    %v1611 = vsel %vm441, %v1592, 0.0
    %1612 = vadd.xlane.f32.xlu0 %v1611
    %v1613 = vpop.xlane.xlu0 %1612
    %v1614 = vsel %vm441, %v1594, 0.0
    %1615 = vadd.xlane.f32.xlu0 %v1614
    %v1616 = vpop.xlane.xlu0 %1615
    %v1617 = vsel %vm441, %v1596, 0.0
    %1618 = vadd.xlane.f32.xlu0 %v1617
    %v1619 = vpop.xlane.xlu0 %1618
    %v1620 = vsel %vm441, %v1598, 0.0
    %1621 = vadd.xlane.f32.xlu0 %v1620
    %v1622 = vpop.xlane.xlu0 %1621
    %v1623 = vrcp.pop %v1601
    %v1624 = vrcp.pop %v1604
    %v1625 = vrcp.pop %v1607
    %v1626 = vrcp.pop %v1610
    %v1627 = vrcp.pop %v1613
    %v1628 = vrcp.pop %v1616
    %v1629 = vrcp.pop %v1619
    %v1630 = vrcp.pop %v1622
    %v1631 = vmul.f32 %v1584, %v1623
    %v1632 = vmul.f32 %v1586, %v1624
    %v1633 = vmul.f32 %v1588, %v1625
    %v1634 = vmul.f32 %v1590, %v1626
    %v1635 = vmul.f32 %v1592, %v1627
    %v1636 = vmul.f32 %v1594, %v1628
    %v1637 = vmul.f32 %v1596, %v1629
    %v1638 = vmul.f32 %v1598, %v1630
    %v1639 = vpack.c.bf16 %v1632, %v1631
    %v1640 = vpack.c.bf16 %v1634, %v1633
    %v1641 = vpack.c.bf16 %v1636, %v1635
    %v1642 = vpack.c.bf16 %v1638, %v1637
    %1643 = vrot.lane.b32.xlu0 %v1347, 64
    %v1644 = vpop.permute.xlu0 %1643
    %v1647 = vsel %vm441, %v1639, 0
    %1649 = vmatprep.subr.bf16.mxu0 0
    %1650 = vmatpush1.bf16.msra.mxu0 0
    %1651 = vmatprep.subr.bf16.mxu0 0
    %1652 = vmatpush1.bf16.msra.mxu0 0
    %1653 = vmatprep.subr.bf16.mxu0 0
    %1654 = vmatpush1.bf16.msra.mxu0 0
    %1655 = vmatprep.subr.bf16.mxu0 0
    %1656 = vmatpush1.bf16.msra.mxu0 0
    %1657 = vmatprep.subr.bf16.mxu0 0
    %1658 = vmatpush1.bf16.msra.mxu0 0
    %1659 = vmatprep.subr.bf16.mxu0 0
    %1660 = vmatpush1.bf16.msra.mxu0 0
    %1661 = vmatprep.subr.bf16.mxu0 0
    %1662 = vmatpush1.bf16.msra.mxu0 0
    %1663 = vmatprep.subr.bf16.mxu0 0
    %1664 = vmatpush1.bf16.msra.mxu0 %v1644
    %1665 = vmatprep.subr.bf16.mxu0 0
    %1666 = vmatpush2.bf16.msra.mxu0 0
    %1667 = vmatprep.subr.bf16.mxu0 0
    %1668 = vmatpush2.bf16.msra.mxu0 0
    %1669 = vmatprep.subr.bf16.mxu0 0
    %1670 = vmatpush2.bf16.msra.mxu0 0
    %1671 = vmatprep.subr.bf16.mxu0 0
    %1672 = vmatpush2.bf16.msra.mxu0 0
    %1673 = vmatprep.subr.bf16.mxu0 0
    %1674 = vmatpush2.bf16.msra.mxu0 0
    %1675 = vmatprep.subr.bf16.mxu0 0
    %1676 = vmatpush2.bf16.msra.mxu0 0
    %1677 = vmatprep.subr.bf16.mxu0 0
    %1678 = vmatpush2.bf16.msra.mxu0 0
    %1679 = vmatprep.subr.bf16.mxu0 0
    %1680 = vmatpush2.bf16.msra.mxu0 0
    %1681 = vmatprep.mubr.bf16.mxu0 0
    %1682 = vmatmul.mubr.bf16.gmra.mxu0 %v1647
    %v1683 = vpop.f32.mrf.mxu0
    %v1684 = vadd.f32 0.0, %v1683
    %v1685 = vpop.f32.mrf.mxu0
    %v1686 = vpop.f32.mrf.mxu0
    %v1687 = vadd.f32 0.0, %v1686
    %v1688 = vpop.f32.mrf.mxu0
    %1689 = vdwg.mxu0
    %1690 = vrot.lane.b32.xlu0 %v1348, 64
    %v1691 = vpop.permute.xlu0 %1690
    %v1694 = vsel %vm441, %v1640, 0
    %1696 = vmatprep.subr.bf16.mxu0 0
    %1697 = vmatpush1.bf16.msra.mxu0 0
    %1698 = vmatprep.subr.bf16.mxu0 0
    %1699 = vmatpush1.bf16.msra.mxu0 0
    %1700 = vmatprep.subr.bf16.mxu0 0
    %1701 = vmatpush1.bf16.msra.mxu0 0
    %1702 = vmatprep.subr.bf16.mxu0 0
    %1703 = vmatpush1.bf16.msra.mxu0 0
    %1704 = vmatprep.subr.bf16.mxu0 0
    %1705 = vmatpush1.bf16.msra.mxu0 0
    %1706 = vmatprep.subr.bf16.mxu0 0
    %1707 = vmatpush1.bf16.msra.mxu0 0
    %1708 = vmatprep.subr.bf16.mxu0 0
    %1709 = vmatpush1.bf16.msra.mxu0 0
    %1710 = vmatprep.subr.bf16.mxu0 0
    %1711 = vmatpush1.bf16.msra.mxu0 %v1691
    %1712 = vmatprep.subr.bf16.mxu0 0
    %1713 = vmatpush2.bf16.msra.mxu0 0
    %1714 = vmatprep.subr.bf16.mxu0 0
    %1715 = vmatpush2.bf16.msra.mxu0 0
    %1716 = vmatprep.subr.bf16.mxu0 0
    %1717 = vmatpush2.bf16.msra.mxu0 0
    %1718 = vmatprep.subr.bf16.mxu0 0
    %1719 = vmatpush2.bf16.msra.mxu0 0
    %1720 = vmatprep.subr.bf16.mxu0 0
    %1721 = vmatpush2.bf16.msra.mxu0 0
    %1722 = vmatprep.subr.bf16.mxu0 0
    %1723 = vmatpush2.bf16.msra.mxu0 0
    %1724 = vmatprep.subr.bf16.mxu0 0
    %1725 = vmatpush2.bf16.msra.mxu0 0
    %1726 = vmatprep.subr.bf16.mxu0 0
    %1727 = vmatpush2.bf16.msra.mxu0 0
    %1728 = vmatprep.mubr.bf16.mxu0 0
    %1729 = vmatmul.mubr.bf16.gmra.mxu0 %v1694
    %v1730 = vpop.f32.mrf.mxu0
    %v1731 = vadd.f32 0.0, %v1730
    %v1732 = vpop.f32.mrf.mxu0
    %v1733 = vpop.f32.mrf.mxu0
    %v1734 = vadd.f32 0.0, %v1733
    %v1735 = vpop.f32.mrf.mxu0
    %1736 = vdwg.mxu0
    %1737 = vrot.lane.b32.xlu0 %v1349, 64
    %v1738 = vpop.permute.xlu0 %1737
    %v1741 = vsel %vm441, %v1641, 0
    %1743 = vmatprep.subr.bf16.mxu0 0
    %1744 = vmatpush1.bf16.msra.mxu0 0
    %1745 = vmatprep.subr.bf16.mxu0 0
    %1746 = vmatpush1.bf16.msra.mxu0 0
    %1747 = vmatprep.subr.bf16.mxu0 0
    %1748 = vmatpush1.bf16.msra.mxu0 0
    %1749 = vmatprep.subr.bf16.mxu0 0
    %1750 = vmatpush1.bf16.msra.mxu0 0
    %1751 = vmatprep.subr.bf16.mxu0 0
    %1752 = vmatpush1.bf16.msra.mxu0 0
    %1753 = vmatprep.subr.bf16.mxu0 0
    %1754 = vmatpush1.bf16.msra.mxu0 0
    %1755 = vmatprep.subr.bf16.mxu0 0
    %1756 = vmatpush1.bf16.msra.mxu0 0
    %1757 = vmatprep.subr.bf16.mxu0 0
    %1758 = vmatpush1.bf16.msra.mxu0 %v1738
    %1759 = vmatprep.subr.bf16.mxu0 0
    %1760 = vmatpush2.bf16.msra.mxu0 0
    %1761 = vmatprep.subr.bf16.mxu0 0
    %1762 = vmatpush2.bf16.msra.mxu0 0
    %1763 = vmatprep.subr.bf16.mxu0 0
    %1764 = vmatpush2.bf16.msra.mxu0 0
    %1765 = vmatprep.subr.bf16.mxu0 0
    %1766 = vmatpush2.bf16.msra.mxu0 0
    %1767 = vmatprep.subr.bf16.mxu0 0
    %1768 = vmatpush2.bf16.msra.mxu0 0
    %1769 = vmatprep.subr.bf16.mxu0 0
    %1770 = vmatpush2.bf16.msra.mxu0 0
    %1771 = vmatprep.subr.bf16.mxu0 0
    %1772 = vmatpush2.bf16.msra.mxu0 0
    %1773 = vmatprep.subr.bf16.mxu0 0
    %1774 = vmatpush2.bf16.msra.mxu0 0
    %1775 = vmatprep.mubr.bf16.mxu0 0
    %1776 = vmatmul.mubr.bf16.gmra.mxu0 %v1741
    %v1777 = vpop.f32.mrf.mxu0
    %v1778 = vadd.f32 0.0, %v1777
    %v1779 = vpop.f32.mrf.mxu0
    %v1780 = vpop.f32.mrf.mxu0
    %v1781 = vadd.f32 0.0, %v1780
    %v1782 = vpop.f32.mrf.mxu0
    %1783 = vdwg.mxu0
    %1784 = vrot.lane.b32.xlu0 %v1350, 64
    %v1785 = vpop.permute.xlu0 %1784
    %v1788 = vsel %vm441, %v1642, 0
    %1790 = vmatprep.subr.bf16.mxu0 0
    %1791 = vmatpush1.bf16.msra.mxu0 0
    %1792 = vmatprep.subr.bf16.mxu0 0
    %1793 = vmatpush1.bf16.msra.mxu0 0
    %1794 = vmatprep.subr.bf16.mxu0 0
    %1795 = vmatpush1.bf16.msra.mxu0 0
    %1796 = vmatprep.subr.bf16.mxu0 0
    %1797 = vmatpush1.bf16.msra.mxu0 0
    %1798 = vmatprep.subr.bf16.mxu0 0
    %1799 = vmatpush1.bf16.msra.mxu0 0
    %1800 = vmatprep.subr.bf16.mxu0 0
    %1801 = vmatpush1.bf16.msra.mxu0 0
    %1802 = vmatprep.subr.bf16.mxu0 0
    %1803 = vmatpush1.bf16.msra.mxu0 0
    %1804 = vmatprep.subr.bf16.mxu0 0
    %1805 = vmatpush1.bf16.msra.mxu0 %v1785
    %1806 = vmatprep.subr.bf16.mxu0 0
    %1807 = vmatpush2.bf16.msra.mxu0 0
    %1808 = vmatprep.subr.bf16.mxu0 0
    %1809 = vmatpush2.bf16.msra.mxu0 0
    %1810 = vmatprep.subr.bf16.mxu0 0
    %1811 = vmatpush2.bf16.msra.mxu0 0
    %1812 = vmatprep.subr.bf16.mxu0 0
    %1813 = vmatpush2.bf16.msra.mxu0 0
    %1814 = vmatprep.subr.bf16.mxu0 0
    %1815 = vmatpush2.bf16.msra.mxu0 0
    %1816 = vmatprep.subr.bf16.mxu0 0
    %1817 = vmatpush2.bf16.msra.mxu0 0
    %1818 = vmatprep.subr.bf16.mxu0 0
    %1819 = vmatpush2.bf16.msra.mxu0 0
    %1820 = vmatprep.subr.bf16.mxu0 0
    %1821 = vmatpush2.bf16.msra.mxu0 0
    %1822 = vmatprep.mubr.bf16.mxu0 0
    %1823 = vmatmul.mubr.bf16.gmra.mxu0 %v1788
    %v1824 = vpop.f32.mrf.mxu0
    %v1825 = vadd.f32 0.0, %v1824
    %v1826 = vpop.f32.mrf.mxu0
    %v1827 = vpop.f32.mrf.mxu0
    %v1828 = vadd.f32 0.0, %v1827
    %v1829 = vpop.f32.mrf.mxu0
    %1830 = vdwg.mxu0
    %v1831 = vpack.c.bf16 %v1687, %v1684
    %v1832 = vpack.c.bf16 %v1734, %v1731
    %v1833 = vpack.c.bf16 %v1781, %v1778
    %v1834 = vpack.c.bf16 %v1828, %v1825
    %s1835 = scalar_lea.vmem %s6, 16
    %v1836 = vld [vmem:[%s1835] sm:$0xf]
    %v1837 = vld [vmem:[%s1835 + $0x4] sm:$0xf]
    %v1838 = vld [vmem:[%s1835 + $0x8] sm:$0xf]
    %v1839 = vld [vmem:[%s1835 + $0xc] sm:$0xf]
    %v1841 = vsel %vm243, %v1831, 0
    %v1844 = vsel %vm733, %v1836, 0
    %1846 = vmatprep.subr.bf16.mxu0 0
    %1847 = vmatpush1.bf16.msra.mxu0 0
    %1848 = vmatprep.subr.bf16.mxu0 0
    %1849 = vmatpush1.bf16.msra.mxu0 0
    %1850 = vmatprep.subr.bf16.mxu0 0
    %1851 = vmatpush1.bf16.msra.mxu0 0
    %1852 = vmatprep.subr.bf16.mxu0 0
    %1853 = vmatpush1.bf16.msra.mxu0 0
    %1854 = vmatprep.subr.bf16.mxu0 0
    %1855 = vmatpush1.bf16.msra.mxu0 0
    %1856 = vmatprep.subr.bf16.mxu0 0
    %1857 = vmatpush1.bf16.msra.mxu0 0
    %1858 = vmatprep.subr.bf16.mxu0 0
    %1859 = vmatpush1.bf16.msra.mxu0 0
    %1860 = vmatprep.subr.bf16.mxu0 0
    %1861 = vmatpush1.bf16.msra.mxu0 %v1844
    %1862 = vmatprep.subr.bf16.mxu0 0
    %1863 = vmatpush2.bf16.msra.mxu0 0
    %1864 = vmatprep.subr.bf16.mxu0 0
    %1865 = vmatpush2.bf16.msra.mxu0 0
    %1866 = vmatprep.subr.bf16.mxu0 0
    %1867 = vmatpush2.bf16.msra.mxu0 0
    %1868 = vmatprep.subr.bf16.mxu0 0
    %1869 = vmatpush2.bf16.msra.mxu0 0
    %1870 = vmatprep.subr.bf16.mxu0 0
    %1871 = vmatpush2.bf16.msra.mxu0 0
    %1872 = vmatprep.subr.bf16.mxu0 0
    %1873 = vmatpush2.bf16.msra.mxu0 0
    %1874 = vmatprep.subr.bf16.mxu0 0
    %1875 = vmatpush2.bf16.msra.mxu0 0
    %1876 = vmatprep.subr.bf16.mxu0 0
    %1877 = vmatpush2.bf16.msra.mxu0 0
    %1878 = vmatprep.mubr.bf16.mxu0 0
    %1879 = vmatmul.mubr.bf16.gmra.mxu0 %v1841
    %v1880 = vpop.f32.mrf.mxu0
    %v1881 = vadd.f32 0.0, %v1880
    %v1882 = vpop.f32.mrf.mxu0
    %v1883 = vpop.f32.mrf.mxu0
    %v1884 = vadd.f32 0.0, %v1883
    %v1885 = vpop.f32.mrf.mxu0
    %1886 = vdwg.mxu0
    %v1888 = vsel %vm243, %v1832, 0
    %v1891 = vsel %vm733, %v1837, 0
    %1893 = vmatprep.subr.bf16.mxu0 0
    %1894 = vmatpush1.bf16.msra.mxu0 0
    %1895 = vmatprep.subr.bf16.mxu0 0
    %1896 = vmatpush1.bf16.msra.mxu0 0
    %1897 = vmatprep.subr.bf16.mxu0 0
    %1898 = vmatpush1.bf16.msra.mxu0 0
    %1899 = vmatprep.subr.bf16.mxu0 0
    %1900 = vmatpush1.bf16.msra.mxu0 0
    %1901 = vmatprep.subr.bf16.mxu0 0
    %1902 = vmatpush1.bf16.msra.mxu0 0
    %1903 = vmatprep.subr.bf16.mxu0 0
    %1904 = vmatpush1.bf16.msra.mxu0 0
    %1905 = vmatprep.subr.bf16.mxu0 0
    %1906 = vmatpush1.bf16.msra.mxu0 0
    %1907 = vmatprep.subr.bf16.mxu0 0
    %1908 = vmatpush1.bf16.msra.mxu0 %v1891
    %1909 = vmatprep.subr.bf16.mxu0 0
    %1910 = vmatpush2.bf16.msra.mxu0 0
    %1911 = vmatprep.subr.bf16.mxu0 0
    %1912 = vmatpush2.bf16.msra.mxu0 0
    %1913 = vmatprep.subr.bf16.mxu0 0
    %1914 = vmatpush2.bf16.msra.mxu0 0
    %1915 = vmatprep.subr.bf16.mxu0 0
    %1916 = vmatpush2.bf16.msra.mxu0 0
    %1917 = vmatprep.subr.bf16.mxu0 0
    %1918 = vmatpush2.bf16.msra.mxu0 0
    %1919 = vmatprep.subr.bf16.mxu0 0
    %1920 = vmatpush2.bf16.msra.mxu0 0
    %1921 = vmatprep.subr.bf16.mxu0 0
    %1922 = vmatpush2.bf16.msra.mxu0 0
    %1923 = vmatprep.subr.bf16.mxu0 0
    %1924 = vmatpush2.bf16.msra.mxu0 0
    %1925 = vmatprep.mubr.bf16.mxu0 0
    %1926 = vmatmul.mubr.bf16.gmra.mxu0 %v1888
    %v1927 = vpop.f32.mrf.mxu0
    %v1928 = vadd.f32 0.0, %v1927
    %v1929 = vpop.f32.mrf.mxu0
    %v1930 = vpop.f32.mrf.mxu0
    %v1931 = vadd.f32 0.0, %v1930
    %v1932 = vpop.f32.mrf.mxu0
    %1933 = vdwg.mxu0
    %v1935 = vsel %vm243, %v1833, 0
    %v1938 = vsel %vm733, %v1838, 0
    %1940 = vmatprep.subr.bf16.mxu0 0
    %1941 = vmatpush1.bf16.msra.mxu0 0
    %1942 = vmatprep.subr.bf16.mxu0 0
    %1943 = vmatpush1.bf16.msra.mxu0 0
    %1944 = vmatprep.subr.bf16.mxu0 0
    %1945 = vmatpush1.bf16.msra.mxu0 0
    %1946 = vmatprep.subr.bf16.mxu0 0
    %1947 = vmatpush1.bf16.msra.mxu0 0
    %1948 = vmatprep.subr.bf16.mxu0 0
    %1949 = vmatpush1.bf16.msra.mxu0 0
    %1950 = vmatprep.subr.bf16.mxu0 0
    %1951 = vmatpush1.bf16.msra.mxu0 0
    %1952 = vmatprep.subr.bf16.mxu0 0
    %1953 = vmatpush1.bf16.msra.mxu0 0
    %1954 = vmatprep.subr.bf16.mxu0 0
    %1955 = vmatpush1.bf16.msra.mxu0 %v1938
    %1956 = vmatprep.subr.bf16.mxu0 0
    %1957 = vmatpush2.bf16.msra.mxu0 0
    %1958 = vmatprep.subr.bf16.mxu0 0
    %1959 = vmatpush2.bf16.msra.mxu0 0
    %1960 = vmatprep.subr.bf16.mxu0 0
    %1961 = vmatpush2.bf16.msra.mxu0 0
    %1962 = vmatprep.subr.bf16.mxu0 0
    %1963 = vmatpush2.bf16.msra.mxu0 0
    %1964 = vmatprep.subr.bf16.mxu0 0
    %1965 = vmatpush2.bf16.msra.mxu0 0
    %1966 = vmatprep.subr.bf16.mxu0 0
    %1967 = vmatpush2.bf16.msra.mxu0 0
    %1968 = vmatprep.subr.bf16.mxu0 0
    %1969 = vmatpush2.bf16.msra.mxu0 0
    %1970 = vmatprep.subr.bf16.mxu0 0
    %1971 = vmatpush2.bf16.msra.mxu0 0
    %1972 = vmatprep.mubr.bf16.mxu0 0
    %1973 = vmatmul.mubr.bf16.gmra.mxu0 %v1935
    %v1974 = vpop.f32.mrf.mxu0
    %v1975 = vadd.f32 0.0, %v1974
    %v1976 = vpop.f32.mrf.mxu0
    %v1977 = vpop.f32.mrf.mxu0
    %v1978 = vadd.f32 0.0, %v1977
    %v1979 = vpop.f32.mrf.mxu0
    %1980 = vdwg.mxu0
    %v1982 = vsel %vm243, %v1834, 0
    %v1985 = vsel %vm733, %v1839, 0
    %1987 = vmatprep.subr.bf16.mxu0 0
    %1988 = vmatpush1.bf16.msra.mxu0 0
    %1989 = vmatprep.subr.bf16.mxu0 0
    %1990 = vmatpush1.bf16.msra.mxu0 0
    %1991 = vmatprep.subr.bf16.mxu0 0
    %1992 = vmatpush1.bf16.msra.mxu0 0
    %1993 = vmatprep.subr.bf16.mxu0 0
    %1994 = vmatpush1.bf16.msra.mxu0 0
    %1995 = vmatprep.subr.bf16.mxu0 0
    %1996 = vmatpush1.bf16.msra.mxu0 0
    %1997 = vmatprep.subr.bf16.mxu0 0
    %1998 = vmatpush1.bf16.msra.mxu0 0
    %1999 = vmatprep.subr.bf16.mxu0 0
    %2000 = vmatpush1.bf16.msra.mxu0 0
    %2001 = vmatprep.subr.bf16.mxu0 0
    %2002 = vmatpush1.bf16.msra.mxu0 %v1985
    %2003 = vmatprep.subr.bf16.mxu0 0
    %2004 = vmatpush2.bf16.msra.mxu0 0
    %2005 = vmatprep.subr.bf16.mxu0 0
    %2006 = vmatpush2.bf16.msra.mxu0 0
    %2007 = vmatprep.subr.bf16.mxu0 0
    %2008 = vmatpush2.bf16.msra.mxu0 0
    %2009 = vmatprep.subr.bf16.mxu0 0
    %2010 = vmatpush2.bf16.msra.mxu0 0
    %2011 = vmatprep.subr.bf16.mxu0 0
    %2012 = vmatpush2.bf16.msra.mxu0 0
    %2013 = vmatprep.subr.bf16.mxu0 0
    %2014 = vmatpush2.bf16.msra.mxu0 0
    %2015 = vmatprep.subr.bf16.mxu0 0
    %2016 = vmatpush2.bf16.msra.mxu0 0
    %2017 = vmatprep.subr.bf16.mxu0 0
    %2018 = vmatpush2.bf16.msra.mxu0 0
    %2019 = vmatprep.mubr.bf16.mxu0 0
    %2020 = vmatmul.mubr.bf16.gmra.mxu0 %v1982
    %v2021 = vpop.f32.mrf.mxu0
    %v2022 = vadd.f32 0.0, %v2021
    %v2023 = vpop.f32.mrf.mxu0
    %v2024 = vpop.f32.mrf.mxu0
    %v2025 = vadd.f32 0.0, %v2024
    %v2026 = vpop.f32.mrf.mxu0
    %2027 = vdwg.mxu0
    %v2028 = vsel %vm78, %v1881, 0.0
    %v2029 = vsel %vm78, %v1928, 0.0
    %v2030 = vadd.f32 %v2028, %v2029
    %v2031 = vsel %vm78, %v1975, 0.0
    %v2032 = vadd.f32 %v2030, %v2031
    %v2033 = vsel %vm78, %v2022, 0.0
    %v2034 = vadd.f32 %v2032, %v2033
    %v2035 = vsel %vm78, %v1884, 0.0
    %v2036 = vsel %vm78, %v1931, 0.0
    %v2037 = vadd.f32 %v2035, %v2036
    %v2038 = vsel %vm78, %v1978, 0.0
    %v2039 = vadd.f32 %v2037, %v2038
    %v2040 = vsel %vm78, %v2025, 0.0
    %v2041 = vadd.f32 %v2039, %v2040
    %v2042 = vadd.f32 %v1183, %v2034
    %v2043 = vadd.f32 %v1184, %v2041
    %s2044 = scalar_lea.vmem %s7, 1
    %v2045 = vld [vmem:[%s2044] sm:$0x1]
    %v2047 = vlaneseq
    %v2048 = vshrl.u32 %v2047, 7
    %v2049 = vsub.s32 0, %v2048
    %v2050 = vrot.slane %v2045, %v2049
    %v2052 = vadd.f32 %v2042, %v2050
    %v2053 = vadd.f32 %v2043, %v2050
    %s2054 = scalar_lea.vmem %s8, 1
    %v2055 = vld [vmem:[%s2054] sm:$0x1]
    %s2056 = scalar_lea.vmem %s9, 1
    %v2057 = vld [vmem:[%s2056] sm:$0x1]
    %v2058 = vsel %vm78, %v2052, 0.0
    %2059 = vadd.xlane.f32.xlu0 %v2058
    %v2060 = vpop.xlane.xlu0 %2059
    %v2061 = vsel %vm78, %v2053, 0.0
    %2062 = vadd.xlane.f32.xlu0 %v2061
    %v2063 = vpop.xlane.xlu0 %2062
    %v2064 = vmul.f32 %v2060, %v85
    %v2065 = vmul.f32 %v2063, %v85
    %v2066 = vsub.f32 %v2052, %v2064
    %v2067 = vsub.f32 %v2053, %v2065
    %v2068 = vmul.f32 %v2066, %v2066
    %v2069 = vmul.f32 %v2067, %v2067
    %v2070 = vsel %vm78, %v2068, 0.0
    %2071 = vadd.xlane.f32.xlu0 %v2070
    %v2072 = vpop.xlane.xlu0 %2071
    %v2073 = vsel %vm78, %v2069, 0.0
    %2074 = vadd.xlane.f32.xlu0 %v2073
    %v2075 = vpop.xlane.xlu0 %2074
    %v2076 = vmul.f32 %v2072, %v85
    %v2077 = vmul.f32 %v2075, %v85
    %v2078 = vadd.f32 %v2076, 1e-05
    %v2079 = vadd.f32 %v2077, 1e-05
    %v2080 = vrsqrt.pop %v2078
    %v2081 = vrsqrt.pop %v2079
    %v2082 = vmul.f32 %v2066, %v2080
    %v2083 = vmul.f32 %v2067, %v2081
    %v2085 = vlaneseq
    %v2086 = vshrl.u32 %v2085, 7
    %v2087 = vsub.s32 0, %v2086
    %v2088 = vrot.slane %v2055, %v2087
    %v2090 = vmul.f32 %v2082, %v2088
    %v2091 = vmul.f32 %v2083, %v2088
    %v2093 = vlaneseq
    %v2094 = vshrl.u32 %v2093, 7
    %v2095 = vsub.s32 0, %v2094
    %v2096 = vrot.slane %v2057, %v2095
    %v2098 = vadd.f32 %v2090, %v2096
    %v2099 = vadd.f32 %v2091, %v2096
    %v2100 = vpack.c.bf16 %v2099, %v2098
    %s2101 = scalar_lea.vmem %s10, 16
    %v2102 = vld [vmem:[%s2101] sm:$0xf]
    %v2103 = vld [vmem:[%s2101 + $0x4] sm:$0xf]
    %v2104 = vld [vmem:[%s2101 + $0x8] sm:$0xf]
    %v2105 = vld [vmem:[%s2101 + $0xc] sm:$0xf]
    %s2106 = scalar_lea.vmem %s11, 1
    %v2107 = vld [vmem:[%s2106] sm:$0x1]
    %v2109 = vlaneseq
    %v2110 = vshrl.u32 %v2109, 7
    %v2111 = vsub.s32 0, %v2110
    %v2112 = vrot.slane %v2107, %v2111
    %v2118 = vunpack.c.l.b16 %v2102
    %v2119 = vunpack.c.l.b16 %v2103
    %v2120 = vunpack.c.l.b16 %v2104
    %v2121 = vunpack.c.l.b16 %v2105
    %v2122 = vpack.c.b16 %v2119, %v2118
    %v2123 = vpack.c.b16 %v2121, %v2120
    %v2127 = vsel %vm78, %v2100, 0
    %2129 = vmatprep.subr.bf16.mxu0 0
    %2130 = vmatpush1.bf16.msra.mxu0 0
    %2131 = vmatprep.subr.bf16.mxu0 0
    %2132 = vmatpush1.bf16.msra.mxu0 0
    %2133 = vmatprep.subr.bf16.mxu0 0
    %2134 = vmatpush1.bf16.msra.mxu0 0
    %2135 = vmatprep.subr.bf16.mxu0 0
    %2136 = vmatpush1.bf16.msra.mxu0 0
    %2137 = vmatprep.subr.bf16.mxu0 0
    %2138 = vmatpush1.bf16.msra.mxu0 0
    %2139 = vmatprep.subr.bf16.mxu0 0
    %2140 = vmatpush1.bf16.msra.mxu0 0
    %2141 = vmatprep.subr.bf16.mxu0 0
    %2142 = vmatpush1.bf16.msra.mxu0 %v2123
    %2143 = vmatprep.subr.bf16.mxu0 0
    %2144 = vmatpush1.bf16.msra.mxu0 %v2122
    %2145 = vmatprep.subr.bf16.mxu0 0
    %2146 = vmatpush2.bf16.msra.mxu0 0
    %2147 = vmatprep.subr.bf16.mxu0 0
    %2148 = vmatpush2.bf16.msra.mxu0 0
    %2149 = vmatprep.subr.bf16.mxu0 0
    %2150 = vmatpush2.bf16.msra.mxu0 0
    %2151 = vmatprep.subr.bf16.mxu0 0
    %2152 = vmatpush2.bf16.msra.mxu0 0
    %2153 = vmatprep.subr.bf16.mxu0 0
    %2154 = vmatpush2.bf16.msra.mxu0 0
    %2155 = vmatprep.subr.bf16.mxu0 0
    %2156 = vmatpush2.bf16.msra.mxu0 0
    %2157 = vmatprep.subr.bf16.mxu0 0
    %2158 = vmatpush2.bf16.msra.mxu0 0
    %2159 = vmatprep.subr.bf16.mxu0 0
    %2160 = vmatpush2.bf16.msra.mxu0 0
    %2161 = vmatprep.mubr.bf16.mxu0 0
    %2162 = vmatmul.mubr.bf16.gmra.mxu0 %v2127
    %v2163 = vpop.f32.mrf.mxu0
    %v2164 = vadd.f32 %v2112, %v2163
    %v2165 = vpop.f32.mrf.mxu0
    %v2166 = vpop.f32.mrf.mxu0
    %v2167 = vadd.f32 %v2112, %v2166
    %v2168 = vpop.f32.mrf.mxu0
    %2169 = vdwg.mxu0
    %v2170 = vmul.f32 %v2164, -1.702
    %v2171 = vmul.f32 %v2167, -1.702
    %v2172 = vmul.f32 %v2170, 1.442695
    %v2173 = vpow.pop %v2172
    %v2174 = vmul.f32 %v2171, 1.442695
    %v2175 = vpow.pop %v2174
    %v2176 = vadd.f32 %v2173, 1.0
    %v2177 = vadd.f32 %v2175, 1.0
    %v2178 = vrcp.pop %v2176
    %v2179 = vmul.f32 1.0, %v2178
    %v2180 = vrcp.pop %v2177
    %v2181 = vmul.f32 1.0, %v2180
    %v2182 = vmul.f32 %v2164, %v2179
    %v2183 = vmul.f32 %v2167, %v2181
    %v2184 = vpack.c.bf16 %v2183, %v2182
    %s2185 = scalar_lea.vmem %s12, 64
    %v2186 = vld [vmem:[%s2185] sm:$0xf]
    %v2187 = vld [vmem:[%s2185 + $0x4] sm:$0xf]
    %v2188 = vld [vmem:[%s2185 + $0x8] sm:$0xf]
    %v2189 = vld [vmem:[%s2185 + $0xc] sm:$0xf]
    %v2190 = vld [vmem:[%s2185 + $0x10] sm:$0xf]
    %v2191 = vld [vmem:[%s2185 + $0x14] sm:$0xf]
    %v2192 = vld [vmem:[%s2185 + $0x18] sm:$0xf]
    %v2193 = vld [vmem:[%s2185 + $0x1c] sm:$0xf]
    %v2194 = vld [vmem:[%s2185 + $0x20] sm:$0xf]
    %v2195 = vld [vmem:[%s2185 + $0x24] sm:$0xf]
    %v2196 = vld [vmem:[%s2185 + $0x28] sm:$0xf]
    %v2197 = vld [vmem:[%s2185 + $0x2c] sm:$0xf]
    %v2198 = vld [vmem:[%s2185 + $0x30] sm:$0xf]
    %v2199 = vld [vmem:[%s2185 + $0x34] sm:$0xf]
    %v2200 = vld [vmem:[%s2185 + $0x38] sm:$0xf]
    %v2201 = vld [vmem:[%s2185 + $0x3c] sm:$0xf]
    %s2202 = scalar_lea.vmem %s13, 1
    %v2203 = vld [vmem:[%s2202] sm:$0x1]
    %v2205 = vlaneseq
    %v2206 = vshrl.u32 %v2205, 7
    %v2207 = vsub.s32 0, %v2206
    %v2208 = vrot.slane %v2203, %v2207
    %v2226 = vunpack.c.l.b16 %v2186
    %v2227 = vunpack.c.l.b16 %v2187
    %v2228 = vunpack.c.l.b16 %v2188
    %v2229 = vunpack.c.l.b16 %v2189
    %v2230 = vunpack.c.l.b16 %v2190
    %v2231 = vunpack.c.l.b16 %v2191
    %v2232 = vunpack.c.l.b16 %v2192
    %v2233 = vunpack.c.l.b16 %v2193
    %v2234 = vunpack.c.l.b16 %v2194
    %v2235 = vunpack.c.l.b16 %v2195
    %v2236 = vunpack.c.l.b16 %v2196
    %v2237 = vunpack.c.l.b16 %v2197
    %v2238 = vunpack.c.l.b16 %v2198
    %v2239 = vunpack.c.l.b16 %v2199
    %v2240 = vunpack.c.l.b16 %v2200
    %v2241 = vunpack.c.l.b16 %v2201
    %v2242 = vpack.c.b16 %v2227, %v2226
    %v2243 = vpack.c.b16 %v2229, %v2228
    %v2244 = vpack.c.b16 %v2231, %v2230
    %v2245 = vpack.c.b16 %v2233, %v2232
    %v2246 = vpack.c.b16 %v2235, %v2234
    %v2247 = vpack.c.b16 %v2237, %v2236
    %v2248 = vpack.c.b16 %v2239, %v2238
    %v2249 = vpack.c.b16 %v2241, %v2240
    %2258 = vmatprep.subr.bf16.mxu0 0
    %2259 = vmatpush1.bf16.msra.mxu0 %v2249
    %2260 = vmatprep.subr.bf16.mxu0 0
    %2261 = vmatpush1.bf16.msra.mxu0 %v2248
    %2262 = vmatprep.subr.bf16.mxu0 0
    %2263 = vmatpush1.bf16.msra.mxu0 %v2247
    %2264 = vmatprep.subr.bf16.mxu0 0
    %2265 = vmatpush1.bf16.msra.mxu0 %v2246
    %2266 = vmatprep.subr.bf16.mxu0 0
    %2267 = vmatpush1.bf16.msra.mxu0 %v2245
    %2268 = vmatprep.subr.bf16.mxu0 0
    %2269 = vmatpush1.bf16.msra.mxu0 %v2244
    %2270 = vmatprep.subr.bf16.mxu0 0
    %2271 = vmatpush1.bf16.msra.mxu0 %v2243
    %2272 = vmatprep.subr.bf16.mxu0 0
    %2273 = vmatpush1.bf16.msra.mxu0 %v2242
    %2274 = vmatprep.subr.bf16.mxu0 0
    %2275 = vmatpush2.bf16.msra.mxu0 0
    %2276 = vmatprep.subr.bf16.mxu0 0
    %2277 = vmatpush2.bf16.msra.mxu0 0
    %2278 = vmatprep.subr.bf16.mxu0 0
    %2279 = vmatpush2.bf16.msra.mxu0 0
    %2280 = vmatprep.subr.bf16.mxu0 0
    %2281 = vmatpush2.bf16.msra.mxu0 0
    %2282 = vmatprep.subr.bf16.mxu0 0
    %2283 = vmatpush2.bf16.msra.mxu0 0
    %2284 = vmatprep.subr.bf16.mxu0 0
    %2285 = vmatpush2.bf16.msra.mxu0 0
    %2286 = vmatprep.subr.bf16.mxu0 0
    %2287 = vmatpush2.bf16.msra.mxu0 0
    %2288 = vmatprep.subr.bf16.mxu0 0
    %2289 = vmatpush2.bf16.msra.mxu0 0
    %2290 = vmatprep.mubr.bf16.mxu0 0
    %2291 = vmatmul.mubr.bf16.gmra.mxu0 %v2184
    %v2292 = vpop.f32.mrf.mxu0
    %v2293 = vadd.f32 %v2208, %v2292
    %v2294 = vpop.f32.mrf.mxu0
    %v2295 = vpop.f32.mrf.mxu0
    %v2296 = vadd.f32 %v2208, %v2295
    %v2297 = vpop.f32.mrf.mxu0
    %2298 = vdwg.mxu0
    %v2299 = vadd.f32 %v2052, %v2293
    %v2300 = vadd.f32 %v2053, %v2296
    %v2301 = vld [vmem:[%s1] sm:$0x3]
    %v2303 = vsel %vm441, %v2301, 0
    %2305 = vmatprep.subr.mxu0 0.0
    %2306 = vmatpush1.msra.mxu0 0.0
    %2307 = vmatprep.subr.mxu0 0.0
    %2308 = vmatpush1.msra.mxu0 0.0
    %2309 = vmatprep.subr.mxu0 0.0
    %2310 = vmatpush1.msra.mxu0 0.0
    %2311 = vmatprep.subr.mxu0 0.0
    %2312 = vmatpush1.msra.mxu0 0.0
    %2313 = vmatprep.subr.mxu0 0.0
    %2314 = vmatpush1.msra.mxu0 0.0
    %2315 = vmatprep.subr.mxu0 0.0
    %2316 = vmatpush1.msra.mxu0 0.0
    %2317 = vmatprep.subr.mxu0 0.0
    %2318 = vmatpush1.msra.mxu0 0.0
    %2319 = vmatprep.subr.mxu0 0.0
    %2320 = vmatpush1.msra.mxu0 0.0
    %2321 = vmatprep.subr.mxu0 0.0
    %2322 = vmatpush1.msra.mxu0 0.0
    %2323 = vmatprep.subr.mxu0 0.0
    %2324 = vmatpush1.msra.mxu0 0.0
    %2325 = vmatprep.subr.mxu0 0.0
    %2326 = vmatpush1.msra.mxu0 0.0
    %2327 = vmatprep.subr.mxu0 0.0
    %2328 = vmatpush1.msra.mxu0 0.0
    %2329 = vmatprep.subr.mxu0 0.0
    %2330 = vmatpush1.msra.mxu0 0.0
    %2331 = vmatprep.subr.mxu0 0.0
    %2332 = vmatpush1.msra.mxu0 0.0
    %2333 = vmatprep.subr.mxu0 0.0
    %2334 = vmatpush1.msra.mxu0 %v2300
    %2335 = vmatprep.subr.mxu0 0.0
    %2336 = vmatpush1.msra.mxu0 %v2299
    %2337 = vmatprep.subr.mxu0 0.0
    %2338 = vmatpush2.msra.mxu0 0.0
    %2339 = vmatprep.subr.mxu0 0.0
    %2340 = vmatpush2.msra.mxu0 0.0
    %2341 = vmatprep.subr.mxu0 0.0
    %2342 = vmatpush2.msra.mxu0 0.0
    %2343 = vmatprep.subr.mxu0 0.0
    %2344 = vmatpush2.msra.mxu0 0.0
    %2345 = vmatprep.subr.mxu0 0.0
    %2346 = vmatpush2.msra.mxu0 0.0
    %2347 = vmatprep.subr.mxu0 0.0
    %2348 = vmatpush2.msra.mxu0 0.0
    %2349 = vmatprep.subr.mxu0 0.0
    %2350 = vmatpush2.msra.mxu0 0.0
    %2351 = vmatprep.subr.mxu0 0.0
    %2352 = vmatpush2.msra.mxu0 0.0
    %2353 = vmatprep.subr.mxu0 0.0
    %2354 = vmatpush2.msra.mxu0 0.0
    %2355 = vmatprep.subr.mxu0 0.0
    %2356 = vmatpush2.msra.mxu0 0.0
    %2357 = vmatprep.subr.mxu0 0.0
    %2358 = vmatpush2.msra.mxu0 0.0
    %2359 = vmatprep.subr.mxu0 0.0
    %2360 = vmatpush2.msra.mxu0 0.0
    %2361 = vmatprep.subr.mxu0 0.0
    %2362 = vmatpush2.msra.mxu0 0.0
    %2363 = vmatprep.subr.mxu0 0.0
    %2364 = vmatpush2.msra.mxu0 0.0
    %2365 = vmatprep.subr.mxu0 0.0
    %2366 = vmatpush2.msra.mxu0 0.0
    %2367 = vmatprep.subr.mxu0 0.0
    %2368 = vmatpush2.msra.mxu0 0.0
    %2369 = vmatprep.mubr.f32.mxu0 0.0
    %2370 = vmatmul.mubr.f32.gmra.mxu0 %v2303
    %v2371 = vpop.f32.mrf.mxu0
    %v2372 = vadd.f32 0.0, %v2371
    %v2373 = vpop.f32.mrf.mxu0
    %2374 = vdwg.mxu0
    %v2375 = vld [vmem:[%s14] sm:$0x1]
    %v2376 = vld [vmem:[%s15] sm:$0x1]
    %vm2377 = vcmask 254976
    %v2378 = vsel %vm2377, %v2372, 0.0
    %2379 = vadd.xlane.f32.xlu0 %v2378
    %v2380 = vpop.xlane.xlu0 %2379
    %v2381 = vmul.f32 %v2380, %v85
    %v2382 = vsub.f32 %v2372, %v2381
    %v2383 = vmul.f32 %v2382, %v2382
    %v2384 = vsel %vm2377, %v2383, 0.0
    %2385 = vadd.xlane.f32.xlu0 %v2384
    %v2386 = vpop.xlane.xlu0 %2385
    %v2387 = vmul.f32 %v2386, %v85
    %v2388 = vadd.f32 %v2387, 1e-05
    %v2389 = vrsqrt.pop %v2388
    %v2390 = vmul.f32 %v2382, %v2389
    %v2392 = vlaneseq
    %v2393 = vshrl.u32 %v2392, 7
    %v2394 = vsub.s32 0, %v2393
    %v2395 = vrot.slane %v2375, %v2394
    %v2397 = vmul.f32 %v2390, %v2395
    %v2399 = vlaneseq
    %v2400 = vshrl.u32 %v2399, 7
    %v2401 = vsub.s32 0, %v2400
    %v2402 = vrot.slane %v2376, %v2401
    %v2404 = vadd.f32 %v2397, %v2402
    %v2405 = vld [vmem:[%s16] sm:$0xff]
    %v2406 = vld [vmem:[%s16 + $0x8] sm:$0xff]
    %v2407 = vld [vmem:[%s16 + $0x10] sm:$0xff]
    %v2408 = vld [vmem:[%s16 + $0x18] sm:$0xff]
    %v2410 = vsel %vm78, %v2404, 0
    %2412 = vmatprep.subr.mxu0 0.0
    %2413 = vmatpush1.msra.mxu0 0.0
    %2414 = vmatprep.subr.mxu0 0.0
    %2415 = vmatpush1.msra.mxu0 0.0
    %2416 = vmatprep.subr.mxu0 0.0
    %2417 = vmatpush1.msra.mxu0 0.0
    %2418 = vmatprep.subr.mxu0 0.0
    %2419 = vmatpush1.msra.mxu0 0.0
    %2420 = vmatprep.subr.mxu0 0.0
    %2421 = vmatpush1.msra.mxu0 0.0
    %2422 = vmatprep.subr.mxu0 0.0
    %2423 = vmatpush1.msra.mxu0 0.0
    %2424 = vmatprep.subr.mxu0 0.0
    %2425 = vmatpush1.msra.mxu0 0.0
    %2426 = vmatprep.subr.mxu0 0.0
    %2427 = vmatpush1.msra.mxu0 0.0
    %2428 = vmatprep.subr.mxu0 0.0
    %2429 = vmatpush1.msra.mxu0 0.0
    %2430 = vmatprep.subr.mxu0 0.0
    %2431 = vmatpush1.msra.mxu0 0.0
    %2432 = vmatprep.subr.mxu0 0.0
    %2433 = vmatpush1.msra.mxu0 0.0
    %2434 = vmatprep.subr.mxu0 0.0
    %2435 = vmatpush1.msra.mxu0 0.0
    %2436 = vmatprep.subr.mxu0 0.0
    %2437 = vmatpush1.msra.mxu0 %v2408
    %2438 = vmatprep.subr.mxu0 0.0
    %2439 = vmatpush1.msra.mxu0 %v2407
    %2440 = vmatprep.subr.mxu0 0.0
    %2441 = vmatpush1.msra.mxu0 %v2406
    %2442 = vmatprep.subr.mxu0 0.0
    %2443 = vmatpush1.msra.mxu0 %v2405
    %2444 = vmatprep.subr.mxu0 0.0
    %2445 = vmatpush2.msra.mxu0 0.0
    %2446 = vmatprep.subr.mxu0 0.0
    %2447 = vmatpush2.msra.mxu0 0.0
    %2448 = vmatprep.subr.mxu0 0.0
    %2449 = vmatpush2.msra.mxu0 0.0
    %2450 = vmatprep.subr.mxu0 0.0
    %2451 = vmatpush2.msra.mxu0 0.0
    %2452 = vmatprep.subr.mxu0 0.0
    %2453 = vmatpush2.msra.mxu0 0.0
    %2454 = vmatprep.subr.mxu0 0.0
    %2455 = vmatpush2.msra.mxu0 0.0
    %2456 = vmatprep.subr.mxu0 0.0
    %2457 = vmatpush2.msra.mxu0 0.0
    %2458 = vmatprep.subr.mxu0 0.0
    %2459 = vmatpush2.msra.mxu0 0.0
    %2460 = vmatprep.subr.mxu0 0.0
    %2461 = vmatpush2.msra.mxu0 0.0
    %2462 = vmatprep.subr.mxu0 0.0
    %2463 = vmatpush2.msra.mxu0 0.0
    %2464 = vmatprep.subr.mxu0 0.0
    %2465 = vmatpush2.msra.mxu0 0.0
    %2466 = vmatprep.subr.mxu0 0.0
    %2467 = vmatpush2.msra.mxu0 0.0
    %2468 = vmatprep.subr.mxu0 0.0
    %2469 = vmatpush2.msra.mxu0 0.0
    %2470 = vmatprep.subr.mxu0 0.0
    %2471 = vmatpush2.msra.mxu0 0.0
    %2472 = vmatprep.subr.mxu0 0.0
    %2473 = vmatpush2.msra.mxu0 0.0
    %2474 = vmatprep.subr.mxu0 0.0
    %2475 = vmatpush2.msra.mxu0 0.0
    %2476 = vmatprep.mubr.f32.mxu0 0.0
    %2477 = vmatmul.mubr.f32.gmra.mxu0 %v2410
    %v2478 = vpop.f32.mrf.mxu0
    %v2479 = vadd.f32 0.0, %v2478
    %v2480 = vpop.f32.mrf.mxu0
    %2481 = vdwg.mxu0
    %vm2482 = vcmask 123904
    %2483 = vst.msk [vmem:[#allocation2] sm:$0x3] %vm2482, %v2479
    // Predicated region
    $region70: #{encode_text.1} parent=1 // pred_check
      _
    $region71: #{encode_text.1} parent=1 // pred_check_branch
      %2485 = sbr.rel (0) target = $region73
    $region72: #{encode_text.1} parent=1 // pred_region
      %s2487 = ssub.s32 32, 32
      %2488 = vsyncadd [#allocation3], %s2487
      %s2490 = sshll.u32 [#allocation2], 4
      %s2491 = int_to_ptr.vmem [resolvable:$true] %s2490
      %2493 = dma.vmem_to_hbm [thread:$0]  %s2491, 32, %s17, [#allocation3]
    $region73: #{encode_text.1} parent=1 // pred_fallthru
      _
    // Predicated region
    $region74: #{encode_text.1} parent=1 // pred_check
      _
    $region75: #{encode_text.1} parent=1 // pred_check_branch
      %2495 = sbr.rel (0) target = $region77
    $region76: #{encode_text.1} parent=1 // pred_region
      %2496 = dma.done [#allocation3], 32
    $region77: #{encode_text.1} parent=1 // pred_fallthru
      _
    %2497 = vsyncpa [#allocation3], 1

</llo_original>
